<compile_context>
chip_gen: v5e
topology: v5e:2x2
jax: 0.10.0
libtpu: 0.0.40
codegen_flags: <defaults>
</compile_context>

<pallas_src>
import functools

import jax
import jax.numpy as jnp
from jax.experimental import pallas as pl
from jax.experimental.pallas import tpu as pltpu

LN_EPS = 1e-5          # torch.nn.LayerNorm default eps
SP_THRESHOLD = 20.0    # torch.nn.Softplus default threshold


def _softplus(x):
    # matches torch Softplus(beta=1, threshold=20): linear above threshold
    return jnp.where(x > SP_THRESHOLD, x,
                     jnp.log1p(jnp.exp(jnp.minimum(x, SP_THRESHOLD))))


def _layernorm(h):
    # LayerNorm over last dim, no affine params, biased variance (like torch)
    mean = jnp.mean(h, axis=-1, keepdims=True)
    var = jnp.mean((h - mean) ** 2, axis=-1, keepdims=True)
    return (h - mean) * jax.lax.rsqrt(var + LN_EPS)


def _linear(h, w_ref, b_ref):
    # matmul in the weight dtype (bf16 on v6e/v7x), f32 accumulate, f32 bias
    return jnp.dot(h.astype(w_ref.dtype), w_ref[...],
                   preferred_element_type=jnp.float32) + b_ref[...]


def _linear_relu(h, w_ref, b_ref):
    return jnp.maximum(_layernorm(_linear(h, w_ref, b_ref)), 0.0)


def scvae_scale_kernel(n_enc, n_dec, x_ref, eps_ref, logxcoeff_ref, *refs):
    """Fused scVAEScale forward for one batch tile.

    refs = [W0, b0, W1, b1, ...] + [zms_ref, xld_ref]
    weight-pair order:
      enc.x2h, enc.seq[0..n_enc-2], fused(enc.h2mu | enc.h2logvar),
      dec.z2h, dec.seq[0..n_dec-2], dec.h2ld
    """
    n_pairs = (n_enc + 1) + (n_dec + 1)
    w_refs = refs[: 2 * n_pairs]
    zms_ref, xld_ref = refs[2 * n_pairs:]
    pairs = iter([(w_refs[2 * i], w_refs[2 * i + 1]) for i in range(n_pairs)])

    z_dim = eps_ref.shape[-1]

    # ---------------- Encoder ----------------
    h = x_ref[...].astype(jnp.float32)
    h = _linear_relu(h, *next(pairs))                  # x2h
    for _ in range(n_enc - 1):                         # seq_nn
        h = _linear_relu(h, *next(pairs))
    heads = _linear(h, *next(pairs))                   # fused [h2mu | h2logvar]
    mu = heads[:, :z_dim]
    logvar = heads[:, z_dim:]

    # ---------------- Reparameterized sample ----------------
    scale = _softplus(logvar)                          # qz = Normal(mu, scale)
    z = mu + scale * eps_ref[...].astype(jnp.float32)  # qz.rsample()

    # ---------------- DecoderSoftMax ----------------
    hd = _linear_relu(z, *next(pairs))                 # z2h
    for _ in range(n_dec - 1):                         # seq_nn
        hd = _linear_relu(hd, *next(pairs))
    ld = _linear(hd, *next(pairs))                     # h2ld
    ld = ld - jnp.max(ld, axis=-1, keepdims=True)      # softmax(dim=1), stable
    e = jnp.exp(ld)
    sm = e / jnp.sum(e, axis=-1, keepdims=True)
    xcoeff = _softplus(logxcoeff_ref[...])             # softplus(logxcoeff)
    xld_ref[...] = sm * xcoeff

    # packed, lane-denser store: [z | mu | scale] -> one output slab
    zms_ref[...] = jnp.concatenate([z, mu, scale], axis=-1)


def _round_up(a, m):
    return ((a + m - 1) // m) * m


def scvae_scale_forward(x, eps, params, logxcoeff, num_enc_layers, num_dec_layers,
                        *, tile_b=256, compute_dtype=jnp.bfloat16):
    """Fused scVAEScale forward.  Returns (z, (qz_mu, qz_scale), xld).

    params: list of (W, b) pairs in order
      enc.x2h, enc.seq[0..n_enc-2], enc.h2mu, enc.h2logvar,
      dec.z2h, dec.seq[0..n_dec-2], dec.h2ld
    with W stored as (in_features, out_features)   (i.e. torch weight.T).
    """
    n_enc, n_dec = num_enc_layers, num_dec_layers
    B, x_dim = x.shape
    z_dim = eps.shape[1]

    # ---- batch tiling: big tiles to fill the MXU M dim and amortize per-step
    # overhead, but keep >= 2 "parallel" grid steps (v7x megacore) when the
    # batch allows.  Ragged batches are zero-padded and sliced back below.
    B8 = _round_up(B, 8)
    tile = _round_up(min(tile_b, B8), 8)
    if B8 // tile < 2 and B8 >= 16:
        tile = _round_up(B8 // 2, 8)
    Bp = _round_up(B, tile)
    if Bp != B:
        pad = Bp - B
        x = jnp.pad(x, ((0, pad), (0, 0)))
        eps = jnp.pad(eps, ((0, pad), (0, 0)))

    # ---- fuse mu / logvar heads into one (h, 2*z_dim) matmul
    enc_body = list(params[:n_enc])
    w_mu, b_mu = params[n_enc]
    w_lv, b_lv = params[n_enc + 1]
    head = (jnp.concatenate([w_mu, w_lv], axis=1),
            jnp.concatenate([b_mu, b_lv], axis=0))
    ordered = enc_body + [head] + list(params[n_enc + 2:])

    # ---- weights in compute_dtype (bf16 on v6e/v7x); biases stay f32
    flat = []
    for w, b in ordered:
        flat.append(jnp.asarray(w).astype(compute_dtype))
        flat.append(jnp.asarray(b).reshape(1, -1).astype(jnp.float32))
    logxcoeff2d = jnp.asarray(logxcoeff).reshape(1, -1).astype(jnp.float32)

    grid = (Bp // tile,)

    def batch_spec(feat):
        return pl.BlockSpec((tile, feat), lambda i: (i, 0))

    def const_spec(shape):
        return pl.BlockSpec(shape, lambda i: (0, 0))

    in_specs = ([batch_spec(x_dim), batch_spec(z_dim), const_spec(logxcoeff2d.shape)]
                + [const_spec(a.shape) for a in flat])
    out_shape = (jax.ShapeDtypeStruct((Bp, 3 * z_dim), jnp.float32),   # [z|mu|scale]
                 jax.ShapeDtypeStruct((Bp, x_dim), jnp.float32))       # xld
    out_specs = (batch_spec(3 * z_dim), batch_spec(x_dim))

    # ---- explicit VMEM budget + scheduler cost hint
    def _nbytes(a):
        return int(a.size) * a.dtype.itemsize

    weight_bytes = sum(_nbytes(a) for a in flat) + _nbytes(logxcoeff2d)
    act_bytes = tile * (x_dim + z_dim + 3 * z_dim + x_dim) * 4
    vmem_limit = int(min(64 * 1024 * 1024,
                         2 * weight_bytes + 4 * act_bytes + (4 << 20)))
    flops = 2 * Bp * sum(int(w.shape[0]) * int(w.shape[1]) for w, _ in ordered)
    transcendentals = Bp * (2 * z_dim + 2 * x_dim) + x_dim
    bytes_accessed = (weight_bytes + _nbytes(x) + _nbytes(eps)
                      + Bp * (3 * z_dim + x_dim) * 4)

    kernel = functools.partial(scvae_scale_kernel, n_enc, n_dec)

    zms, xld = pl.pallas_call(
        kernel,
        out_shape=out_shape,
        grid_spec=pltpu.PrefetchScalarGridSpec(
            num_scalar_prefetch=0,
            grid=grid,
            in_specs=in_specs,
            out_specs=out_specs,
        ),
        compiler_params=pltpu.CompilerParams(
            dimension_semantics=("parallel",),
            vmem_limit_bytes=vmem_limit),
        cost_estimate=pl.CostEstimate(
            flops=int(flops),
            transcendentals=int(transcendentals),
            bytes_accessed=int(bytes_accessed)),
    )(x, eps, logxcoeff2d, *flat)

    z = zms[:B, :z_dim]
    mu = zms[:B, z_dim:2 * z_dim]
    scale = zms[:B, 2 * z_dim:]
    return z, (mu, scale), xld[:B]


# ------------------------ parameter construction ------------------------
def init_params(key, x_dim, xz_dim, enc_h, dec_h, n_enc, n_dec):
    """Deterministic synthetic weights; order matches scvae_scale_forward docs."""
    shapes = []
    shapes.append((x_dim, enc_h))                     # enc.x2h
    shapes += [(enc_h, enc_h)] * (n_enc - 1)          # enc.seq_nn
    shapes.append((enc_h, xz_dim))                    # enc.h2mu
    shapes.append((enc_h, xz_dim))                    # enc.h2logvar
    shapes.append((xz_dim, dec_h))                    # dec.z2h
    shapes += [(dec_h, dec_h)] * (n_dec - 1)          # dec.seq_nn
    shapes.append((dec_h, x_dim))                     # dec.h2ld

    params = []
    for i, (fan_in, fan_out) in enumerate(shapes):
        kw, kb = jax.random.split(jax.random.fold_in(key, i))
        w = 0.1 * jax.random.normal(kw, (fan_in, fan_out), dtype=jnp.float32)
        b = 0.05 * jax.random.normal(kb, (fan_out,), dtype=jnp.float32)
        params.append((w, b))
    return params


# ------------------------ pure-JAX reference (for checking) ------------------------
def scvae_scale_reference(x, eps, params, logxcoeff, n_enc, n_dec, compute_dtype):
    dt = compute_dtype

    def lin(h, p):
        w, b = p
        return jnp.dot(h.astype(dt), w.astype(dt),
                       preferred_element_type=jnp.float32) + b

    def lrelu(h, p):
        return jnp.maximum(_layernorm(lin(h, p)), 0.0)

    it = iter(params)
    h = lrelu(x, next(it))
    for _ in range(n_enc - 1):
        h = lrelu(h, next(it))
    mu = lin(h, next(it))
    logvar = lin(h, next(it))
    scale = jax.nn.softplus(logvar)
    z = mu + scale * eps
    hd = lrelu(z, next(it))
    for _ in range(n_dec - 1):
        hd = lrelu(hd, next(it))
    ld = lin(hd, next(it))
    xld = jax.nn.softmax(ld, axis=-1) * jax.nn.softplus(logxcoeff)
    return z, (mu, scale), xld


if __name__ == "__main__":
    # small, module-consistent shapes (ragged batch exercises the padding path)
    B = 20
    x_dim = 32
    xz_dim = 8
    enc_z_h_dim = 32
    dec_z_h_dim = 32
    num_enc_z_layers = 2
    # scVAEScale builds its decoder with num_enc_z_layers
    num_dec_z_layers = num_enc_z_layers

    key = jax.random.PRNGKey(0)
    kx, keps, kp, kc = jax.random.split(key, 4)

    x = jax.random.normal(kx, (B, x_dim), dtype=jnp.float32)
    eps = jax.random.normal(keps, (B, xz_dim), dtype=jnp.float32)     # rsample noise
    logxcoeff = jax.random.normal(kc, (x_dim,), dtype=jnp.float32)    # self.logxcoeff
    params = init_params(kp, x_dim, xz_dim, enc_z_h_dim, dec_z_h_dim,
                         num_enc_z_layers, num_dec_z_layers)

    z, (qz_mu, qz_scale), xld = scvae_scale_forward(
        x, eps, params, logxcoeff, num_enc_z_layers, num_dec_z_layers,
        tile_b=256, compute_dtype=jnp.bfloat16)
    jax.block_until_ready((z, qz_mu, qz_scale, xld))

    # sanity check vs pure-JAX reference (same bf16 matmul / f32 accumulate)
    z_r, (mu_r, sc_r), xld_r = scvae_scale_reference(
        x, eps, params, logxcoeff, num_enc_z_layers, num_dec_z_layers, jnp.bfloat16)
    for got, want in ((z, z_r), (qz_mu, mu_r), (qz_scale, sc_r), (xld, xld_r)):
        assert got.shape == want.shape
        assert jnp.allclose(got, want, atol=2e-3, rtol=2e-3), \
            float(jnp.max(jnp.abs(got - want)))

    print("KERNEL_OK")
</pallas_src>

<mosaic_0001>
module attributes {stable_mosaic.version = 11 : i64} {
  func.func @scvae_scale_kernel(%arg0: i32, %arg1: memref<16x32xf32, #tpu.memory_space<vmem>>, %arg2: memref<16x8xf32, #tpu.memory_space<vmem>>, %arg3: memref<1x32xf32, #tpu.memory_space<vmem>>, %arg4: memref<32x32xbf16, #tpu.memory_space<vmem>>, %arg5: memref<1x32xf32, #tpu.memory_space<vmem>>, %arg6: memref<32x32xbf16, #tpu.memory_space<vmem>>, %arg7: memref<1x32xf32, #tpu.memory_space<vmem>>, %arg8: memref<32x16xbf16, #tpu.memory_space<vmem>>, %arg9: memref<1x16xf32, #tpu.memory_space<vmem>>, %arg10: memref<8x32xbf16, #tpu.memory_space<vmem>>, %arg11: memref<1x32xf32, #tpu.memory_space<vmem>>, %arg12: memref<32x32xbf16, #tpu.memory_space<vmem>>, %arg13: memref<1x32xf32, #tpu.memory_space<vmem>>, %arg14: memref<32x32xbf16, #tpu.memory_space<vmem>>, %arg15: memref<1x32xf32, #tpu.memory_space<vmem>>, %arg16: memref<16x24xf32, #tpu.memory_space<vmem>>, %arg17: memref<16x32xf32, #tpu.memory_space<vmem>>) attributes {dimension_semantics = [#tpu.dimension_semantics<parallel>], iteration_bounds = array<i64: 2>, scalar_prefetch = 0 : i64, scratch_operands = 0 : i64, tpu.core_type = #tpu.core_type<tc>, window_params = [{transform_indices = @transform_0, window_bounds = array<i64: 16, 32>}, {transform_indices = @transform_1, window_bounds = array<i64: 16, 8>}, {pipeline_mode = #tpu.pipeline_mode<synchronous>, transform_indices = @transform_2, window_bounds = array<i64: 1, 32>}, {pipeline_mode = #tpu.pipeline_mode<synchronous>, transform_indices = @transform_3, window_bounds = array<i64: 32, 32>}, {pipeline_mode = #tpu.pipeline_mode<synchronous>, transform_indices = @transform_4, window_bounds = array<i64: 1, 32>}, {pipeline_mode = #tpu.pipeline_mode<synchronous>, transform_indices = @transform_5, window_bounds = array<i64: 32, 32>}, {pipeline_mode = #tpu.pipeline_mode<synchronous>, transform_indices = @transform_6, window_bounds = array<i64: 1, 32>}, {pipeline_mode = #tpu.pipeline_mode<synchronous>, transform_indices = @transform_7, window_bounds = array<i64: 32, 16>}, {pipeline_mode = #tpu.pipeline_mode<synchronous>, transform_indices = @transform_8, window_bounds = array<i64: 1, 16>}, {pipeline_mode = #tpu.pipeline_mode<synchronous>, transform_indices = @transform_9, window_bounds = array<i64: 8, 32>}, {pipeline_mode = #tpu.pipeline_mode<synchronous>, transform_indices = @transform_10, window_bounds = array<i64: 1, 32>}, {pipeline_mode = #tpu.pipeline_mode<synchronous>, transform_indices = @transform_11, window_bounds = array<i64: 32, 32>}, {pipeline_mode = #tpu.pipeline_mode<synchronous>, transform_indices = @transform_12, window_bounds = array<i64: 1, 32>}, {pipeline_mode = #tpu.pipeline_mode<synchronous>, transform_indices = @transform_13, window_bounds = array<i64: 32, 32>}, {pipeline_mode = #tpu.pipeline_mode<synchronous>, transform_indices = @transform_14, window_bounds = array<i64: 1, 32>}, {transform_indices = @transform_15, window_bounds = array<i64: 16, 24>}, {transform_indices = @transform_16, window_bounds = array<i64: 16, 32>}]} {
    %c0 = arith.constant 0 : index
    %c0_0 = arith.constant 0 : index
    %0 = vector.load %arg1[%c0, %c0_0] : memref<16x32xf32, #tpu.memory_space<vmem>>, vector<16x32xf32>
    %1 = arith.truncf %0 : vector<16x32xf32> to vector<16x32xbf16>
    %c0_1 = arith.constant 0 : index
    %c0_2 = arith.constant 0 : index
    %2 = vector.load %arg4[%c0_1, %c0_2] : memref<32x32xbf16, #tpu.memory_space<vmem>>, vector<32x32xbf16>
    %cst = arith.constant dense<0.000000e+00> : vector<16x32xf32>
    %3 = tpu.matmul %1, %2, %cst {dimension_numbers = #tpu.dot_dimension_numbers<[1], [0], [0], [1], [0, 0, 1, 1], [], []>} : vector<16x32xbf16>, vector<32x32xbf16>, vector<16x32xf32> -> vector<16x32xf32>
    %c0_3 = arith.constant 0 : index
    %c0_4 = arith.constant 0 : index
    %4 = vector.load %arg5[%c0_3, %c0_4] : memref<1x32xf32, #tpu.memory_space<vmem>>, vector<1x32xf32>
    %5 = vector.broadcast %4 : vector<1x32xf32> to vector<16x32xf32>
    %6 = arith.addf %3, %5 : vector<16x32xf32>
    %cst_5 = arith.constant dense<0.000000e+00> : vector<16xf32>
    %7 = vector.multi_reduction <add>, %6, %cst_5 [1] : vector<16x32xf32> to vector<16xf32>
    %8 = vector.shape_cast %7 : vector<16xf32> to vector<16x1xf32>
    %cst_6 = arith.constant 3.200000e+01 : f32
    %9 = vector.broadcast %cst_6 : f32 to vector<16x1xf32>
    %10 = arith.divf %8, %9 : vector<16x1xf32>
    %11 = vector.broadcast %10 : vector<16x1xf32> to vector<16x32xf32>
    %12 = arith.subf %6, %11 : vector<16x32xf32>
    %13 = arith.mulf %12, %12 : vector<16x32xf32>
    %cst_7 = arith.constant dense<0.000000e+00> : vector<16xf32>
    %14 = vector.multi_reduction <add>, %13, %cst_7 [1] : vector<16x32xf32> to vector<16xf32>
    %15 = vector.shape_cast %14 : vector<16xf32> to vector<16x1xf32>
    %cst_8 = arith.constant 3.200000e+01 : f32
    %16 = vector.broadcast %cst_8 : f32 to vector<16x1xf32>
    %17 = arith.divf %15, %16 : vector<16x1xf32>
    %18 = vector.broadcast %10 : vector<16x1xf32> to vector<16x32xf32>
    %19 = arith.subf %6, %18 : vector<16x32xf32>
    %cst_9 = arith.constant 9.99999974E-6 : f32
    %20 = vector.broadcast %cst_9 : f32 to vector<16x1xf32>
    %21 = arith.addf %17, %20 : vector<16x1xf32>
    %22 = math.rsqrt %21 : vector<16x1xf32>
    %23 = vector.broadcast %22 : vector<16x1xf32> to vector<16x32xf32>
    %24 = arith.mulf %19, %23 : vector<16x32xf32>
    %cst_10 = arith.constant 0.000000e+00 : f32
    %25 = vector.broadcast %cst_10 : f32 to vector<16x32xf32>
    %26 = arith.maximumf %24, %25 : vector<16x32xf32>
    %27 = arith.truncf %26 : vector<16x32xf32> to vector<16x32xbf16>
    %c0_11 = arith.constant 0 : index
    %c0_12 = arith.constant 0 : index
    %28 = vector.load %arg6[%c0_11, %c0_12] : memref<32x32xbf16, #tpu.memory_space<vmem>>, vector<32x32xbf16>
    %cst_13 = arith.constant dense<0.000000e+00> : vector<16x32xf32>
    %29 = tpu.matmul %27, %28, %cst_13 {dimension_numbers = #tpu.dot_dimension_numbers<[1], [0], [0], [1], [0, 0, 1, 1], [], []>} : vector<16x32xbf16>, vector<32x32xbf16>, vector<16x32xf32> -> vector<16x32xf32>
    %c0_14 = arith.constant 0 : index
    %c0_15 = arith.constant 0 : index
    %30 = vector.load %arg7[%c0_14, %c0_15] : memref<1x32xf32, #tpu.memory_space<vmem>>, vector<1x32xf32>
    %31 = vector.broadcast %30 : vector<1x32xf32> to vector<16x32xf32>
    %32 = arith.addf %29, %31 : vector<16x32xf32>
    %cst_16 = arith.constant dense<0.000000e+00> : vector<16xf32>
    %33 = vector.multi_reduction <add>, %32, %cst_16 [1] : vector<16x32xf32> to vector<16xf32>
    %34 = vector.shape_cast %33 : vector<16xf32> to vector<16x1xf32>
    %cst_17 = arith.constant 3.200000e+01 : f32
    %35 = vector.broadcast %cst_17 : f32 to vector<16x1xf32>
    %36 = arith.divf %34, %35 : vector<16x1xf32>
    %37 = vector.broadcast %36 : vector<16x1xf32> to vector<16x32xf32>
    %38 = arith.subf %32, %37 : vector<16x32xf32>
    %39 = arith.mulf %38, %38 : vector<16x32xf32>
    %cst_18 = arith.constant dense<0.000000e+00> : vector<16xf32>
    %40 = vector.multi_reduction <add>, %39, %cst_18 [1] : vector<16x32xf32> to vector<16xf32>
    %41 = vector.shape_cast %40 : vector<16xf32> to vector<16x1xf32>
    %cst_19 = arith.constant 3.200000e+01 : f32
    %42 = vector.broadcast %cst_19 : f32 to vector<16x1xf32>
    %43 = arith.divf %41, %42 : vector<16x1xf32>
    %44 = vector.broadcast %36 : vector<16x1xf32> to vector<16x32xf32>
    %45 = arith.subf %32, %44 : vector<16x32xf32>
    %cst_20 = arith.constant 9.99999974E-6 : f32
    %46 = vector.broadcast %cst_20 : f32 to vector<16x1xf32>
    %47 = arith.addf %43, %46 : vector<16x1xf32>
    %48 = math.rsqrt %47 : vector<16x1xf32>
    %49 = vector.broadcast %48 : vector<16x1xf32> to vector<16x32xf32>
    %50 = arith.mulf %45, %49 : vector<16x32xf32>
    %cst_21 = arith.constant 0.000000e+00 : f32
    %51 = vector.broadcast %cst_21 : f32 to vector<16x32xf32>
    %52 = arith.maximumf %50, %51 : vector<16x32xf32>
    %53 = arith.truncf %52 : vector<16x32xf32> to vector<16x32xbf16>
    %c0_22 = arith.constant 0 : index
    %c0_23 = arith.constant 0 : index
    %54 = vector.load %arg8[%c0_22, %c0_23] : memref<32x16xbf16, #tpu.memory_space<vmem>>, vector<32x16xbf16>
    %cst_24 = arith.constant dense<0.000000e+00> : vector<16x16xf32>
    %55 = tpu.matmul %53, %54, %cst_24 {dimension_numbers = #tpu.dot_dimension_numbers<[1], [0], [0], [1], [0, 0, 1, 1], [], []>} : vector<16x32xbf16>, vector<32x16xbf16>, vector<16x16xf32> -> vector<16x16xf32>
    %c0_25 = arith.constant 0 : index
    %c0_26 = arith.constant 0 : index
    %56 = vector.load %arg9[%c0_25, %c0_26] : memref<1x16xf32, #tpu.memory_space<vmem>>, vector<1x16xf32>
    %57 = vector.broadcast %56 : vector<1x16xf32> to vector<16x16xf32>
    %58 = arith.addf %55, %57 : vector<16x16xf32>
    %59 = vector.extract_strided_slice %58 {offsets = [0, 0], sizes = [16, 8], strides = [1, 1]} : vector<16x16xf32> to vector<16x8xf32>
    %60 = vector.extract_strided_slice %58 {offsets = [0, 8], sizes = [16, 8], strides = [1, 1]} : vector<16x16xf32> to vector<16x8xf32>
    %cst_27 = arith.constant 2.000000e+01 : f32
    %61 = vector.broadcast %cst_27 : f32 to vector<16x8xf32>
    %62 = arith.cmpf ogt, %60, %61 : vector<16x8xf32>
    %cst_28 = arith.constant 2.000000e+01 : f32
    %63 = vector.broadcast %cst_28 : f32 to vector<16x8xf32>
    %64 = arith.minimumf %60, %63 : vector<16x8xf32>
    %65 = math.exp %64 : vector<16x8xf32>
    %66 = math.log1p %65 : vector<16x8xf32>
    %67 = arith.select %62, %60, %66 : vector<16x8xi1>, vector<16x8xf32>
    %c0_29 = arith.constant 0 : index
    %c0_30 = arith.constant 0 : index
    %68 = vector.load %arg2[%c0_29, %c0_30] : memref<16x8xf32, #tpu.memory_space<vmem>>, vector<16x8xf32>
    %69 = arith.mulf %67, %68 : vector<16x8xf32>
    %70 = arith.addf %59, %69 : vector<16x8xf32>
    %71 = arith.truncf %70 : vector<16x8xf32> to vector<16x8xbf16>
    %c0_31 = arith.constant 0 : index
    %c0_32 = arith.constant 0 : index
    %72 = vector.load %arg10[%c0_31, %c0_32] : memref<8x32xbf16, #tpu.memory_space<vmem>>, vector<8x32xbf16>
    %cst_33 = arith.constant dense<0.000000e+00> : vector<16x32xf32>
    %73 = tpu.matmul %71, %72, %cst_33 {dimension_numbers = #tpu.dot_dimension_numbers<[1], [0], [0], [1], [0, 0, 1, 1], [], []>} : vector<16x8xbf16>, vector<8x32xbf16>, vector<16x32xf32> -> vector<16x32xf32>
    %c0_34 = arith.constant 0 : index
    %c0_35 = arith.constant 0 : index
    %74 = vector.load %arg11[%c0_34, %c0_35] : memref<1x32xf32, #tpu.memory_space<vmem>>, vector<1x32xf32>
    %75 = vector.broadcast %74 : vector<1x32xf32> to vector<16x32xf32>
    %76 = arith.addf %73, %75 : vector<16x32xf32>
    %cst_36 = arith.constant dense<0.000000e+00> : vector<16xf32>
    %77 = vector.multi_reduction <add>, %76, %cst_36 [1] : vector<16x32xf32> to vector<16xf32>
    %78 = vector.shape_cast %77 : vector<16xf32> to vector<16x1xf32>
    %cst_37 = arith.constant 3.200000e+01 : f32
    %79 = vector.broadcast %cst_37 : f32 to vector<16x1xf32>
    %80 = arith.divf %78, %79 : vector<16x1xf32>
    %81 = vector.broadcast %80 : vector<16x1xf32> to vector<16x32xf32>
    %82 = arith.subf %76, %81 : vector<16x32xf32>
    %83 = arith.mulf %82, %82 : vector<16x32xf32>
    %cst_38 = arith.constant dense<0.000000e+00> : vector<16xf32>
    %84 = vector.multi_reduction <add>, %83, %cst_38 [1] : vector<16x32xf32> to vector<16xf32>
    %85 = vector.shape_cast %84 : vector<16xf32> to vector<16x1xf32>
    %cst_39 = arith.constant 3.200000e+01 : f32
    %86 = vector.broadcast %cst_39 : f32 to vector<16x1xf32>
    %87 = arith.divf %85, %86 : vector<16x1xf32>
    %88 = vector.broadcast %80 : vector<16x1xf32> to vector<16x32xf32>
    %89 = arith.subf %76, %88 : vector<16x32xf32>
    %cst_40 = arith.constant 9.99999974E-6 : f32
    %90 = vector.broadcast %cst_40 : f32 to vector<16x1xf32>
    %91 = arith.addf %87, %90 : vector<16x1xf32>
    %92 = math.rsqrt %91 : vector<16x1xf32>
    %93 = vector.broadcast %92 : vector<16x1xf32> to vector<16x32xf32>
    %94 = arith.mulf %89, %93 : vector<16x32xf32>
    %cst_41 = arith.constant 0.000000e+00 : f32
    %95 = vector.broadcast %cst_41 : f32 to vector<16x32xf32>
    %96 = arith.maximumf %94, %95 : vector<16x32xf32>
    %97 = arith.truncf %96 : vector<16x32xf32> to vector<16x32xbf16>
    %c0_42 = arith.constant 0 : index
    %c0_43 = arith.constant 0 : index
    %98 = vector.load %arg12[%c0_42, %c0_43] : memref<32x32xbf16, #tpu.memory_space<vmem>>, vector<32x32xbf16>
    %cst_44 = arith.constant dense<0.000000e+00> : vector<16x32xf32>
    %99 = tpu.matmul %97, %98, %cst_44 {dimension_numbers = #tpu.dot_dimension_numbers<[1], [0], [0], [1], [0, 0, 1, 1], [], []>} : vector<16x32xbf16>, vector<32x32xbf16>, vector<16x32xf32> -> vector<16x32xf32>
    %c0_45 = arith.constant 0 : index
    %c0_46 = arith.constant 0 : index
    %100 = vector.load %arg13[%c0_45, %c0_46] : memref<1x32xf32, #tpu.memory_space<vmem>>, vector<1x32xf32>
    %101 = vector.broadcast %100 : vector<1x32xf32> to vector<16x32xf32>
    %102 = arith.addf %99, %101 : vector<16x32xf32>
    %cst_47 = arith.constant dense<0.000000e+00> : vector<16xf32>
    %103 = vector.multi_reduction <add>, %102, %cst_47 [1] : vector<16x32xf32> to vector<16xf32>
    %104 = vector.shape_cast %103 : vector<16xf32> to vector<16x1xf32>
    %cst_48 = arith.constant 3.200000e+01 : f32
    %105 = vector.broadcast %cst_48 : f32 to vector<16x1xf32>
    %106 = arith.divf %104, %105 : vector<16x1xf32>
    %107 = vector.broadcast %106 : vector<16x1xf32> to vector<16x32xf32>
    %108 = arith.subf %102, %107 : vector<16x32xf32>
    %109 = arith.mulf %108, %108 : vector<16x32xf32>
    %cst_49 = arith.constant dense<0.000000e+00> : vector<16xf32>
    %110 = vector.multi_reduction <add>, %109, %cst_49 [1] : vector<16x32xf32> to vector<16xf32>
    %111 = vector.shape_cast %110 : vector<16xf32> to vector<16x1xf32>
    %cst_50 = arith.constant 3.200000e+01 : f32
    %112 = vector.broadcast %cst_50 : f32 to vector<16x1xf32>
    %113 = arith.divf %111, %112 : vector<16x1xf32>
    %114 = vector.broadcast %106 : vector<16x1xf32> to vector<16x32xf32>
    %115 = arith.subf %102, %114 : vector<16x32xf32>
    %cst_51 = arith.constant 9.99999974E-6 : f32
    %116 = vector.broadcast %cst_51 : f32 to vector<16x1xf32>
    %117 = arith.addf %113, %116 : vector<16x1xf32>
    %118 = math.rsqrt %117 : vector<16x1xf32>
    %119 = vector.broadcast %118 : vector<16x1xf32> to vector<16x32xf32>
    %120 = arith.mulf %115, %119 : vector<16x32xf32>
    %cst_52 = arith.constant 0.000000e+00 : f32
    %121 = vector.broadcast %cst_52 : f32 to vector<16x32xf32>
    %122 = arith.maximumf %120, %121 : vector<16x32xf32>
    %123 = arith.truncf %122 : vector<16x32xf32> to vector<16x32xbf16>
    %c0_53 = arith.constant 0 : index
    %c0_54 = arith.constant 0 : index
    %124 = vector.load %arg14[%c0_53, %c0_54] : memref<32x32xbf16, #tpu.memory_space<vmem>>, vector<32x32xbf16>
    %cst_55 = arith.constant dense<0.000000e+00> : vector<16x32xf32>
    %125 = tpu.matmul %123, %124, %cst_55 {dimension_numbers = #tpu.dot_dimension_numbers<[1], [0], [0], [1], [0, 0, 1, 1], [], []>} : vector<16x32xbf16>, vector<32x32xbf16>, vector<16x32xf32> -> vector<16x32xf32>
    %c0_56 = arith.constant 0 : index
    %c0_57 = arith.constant 0 : index
    %126 = vector.load %arg15[%c0_56, %c0_57] : memref<1x32xf32, #tpu.memory_space<vmem>>, vector<1x32xf32>
    %127 = vector.broadcast %126 : vector<1x32xf32> to vector<16x32xf32>
    %128 = arith.addf %125, %127 : vector<16x32xf32>
    %cst_58 = arith.constant dense<0xFF800000> : vector<16xf32>
    %129 = vector.multi_reduction <maximumf>, %128, %cst_58 [1] : vector<16x32xf32> to vector<16xf32>
    %130 = vector.shape_cast %129 : vector<16xf32> to vector<16x1xf32>
    %131 = vector.broadcast %130 : vector<16x1xf32> to vector<16x32xf32>
    %132 = arith.subf %128, %131 : vector<16x32xf32>
    %133 = math.exp %132 : vector<16x32xf32>
    %cst_59 = arith.constant dense<0.000000e+00> : vector<16xf32>
    %134 = vector.multi_reduction <add>, %133, %cst_59 [1] : vector<16x32xf32> to vector<16xf32>
    %135 = vector.shape_cast %134 : vector<16xf32> to vector<16x1xf32>
    %136 = vector.broadcast %135 : vector<16x1xf32> to vector<16x32xf32>
    %137 = arith.divf %133, %136 : vector<16x32xf32>
    %c0_60 = arith.constant 0 : index
    %c0_61 = arith.constant 0 : index
    %138 = vector.load %arg3[%c0_60, %c0_61] : memref<1x32xf32, #tpu.memory_space<vmem>>, vector<1x32xf32>
    %cst_62 = arith.constant 2.000000e+01 : f32
    %139 = vector.broadcast %cst_62 : f32 to vector<1x32xf32>
    %140 = arith.cmpf ogt, %138, %139 : vector<1x32xf32>
    %cst_63 = arith.constant 2.000000e+01 : f32
    %141 = vector.broadcast %cst_63 : f32 to vector<1x32xf32>
    %142 = arith.minimumf %138, %141 : vector<1x32xf32>
    %143 = math.exp %142 : vector<1x32xf32>
    %144 = math.log1p %143 : vector<1x32xf32>
    %145 = arith.select %140, %138, %144 : vector<1x32xi1>, vector<1x32xf32>
    %146 = vector.broadcast %145 : vector<1x32xf32> to vector<16x32xf32>
    %147 = arith.mulf %137, %146 : vector<16x32xf32>
    %c0_64 = arith.constant 0 : index
    %c0_65 = arith.constant 0 : index
    %148 = vector.load %arg17[%c0_64, %c0_65] : memref<16x32xf32, #tpu.memory_space<vmem>>, vector<16x32xf32>
    tpu.vector_store %arg17[%c0_64, %c0_65], %147 {strides = array<i32>} : memref<16x32xf32, #tpu.memory_space<vmem>>, vector<16x32xf32>,
    %149 = tpu.concatenate %70, %59, %67 in 1 : vector<16x8xf32>, vector<16x8xf32>, vector<16x8xf32> -> vector<16x24xf32>
    %c0_66 = arith.constant 0 : index
    %c0_67 = arith.constant 0 : index
    %150 = vector.load %arg16[%c0_66, %c0_67] : memref<16x24xf32, #tpu.memory_space<vmem>>, vector<16x24xf32>
    tpu.vector_store %arg16[%c0_66, %c0_67], %149 {strides = array<i32>} : memref<16x24xf32, #tpu.memory_space<vmem>>, vector<16x24xf32>,
    return
  }
  func.func @transform_0(%arg0: i32) -> (i32, i32) {
    %c0_i32 = arith.constant 0 : i32
    %c0_i32_0 = arith.constant 0 : i32
    return %arg0, %c0_i32 : i32, i32
  }
  func.func @transform_1(%arg0: i32) -> (i32, i32) {
    %c0_i32 = arith.constant 0 : i32
    %c0_i32_0 = arith.constant 0 : i32
    return %arg0, %c0_i32 : i32, i32
  }
  func.func @transform_2(%arg0: i32) -> (i32, i32) {
    %c0_i32 = arith.constant 0 : i32
    %c0_i32_0 = arith.constant 0 : i32
    %c0_i32_1 = arith.constant 0 : i32
    return %c0_i32, %c0_i32_0 : i32, i32
  }
  func.func @transform_3(%arg0: i32) -> (i32, i32) {
    %c0_i32 = arith.constant 0 : i32
    %c0_i32_0 = arith.constant 0 : i32
    %c0_i32_1 = arith.constant 0 : i32
    return %c0_i32, %c0_i32_0 : i32, i32
  }
  func.func @transform_4(%arg0: i32) -> (i32, i32) {
    %c0_i32 = arith.constant 0 : i32
    %c0_i32_0 = arith.constant 0 : i32
    %c0_i32_1 = arith.constant 0 : i32
    return %c0_i32, %c0_i32_0 : i32, i32
  }
  func.func @transform_5(%arg0: i32) -> (i32, i32) {
    %c0_i32 = arith.constant 0 : i32
    %c0_i32_0 = arith.constant 0 : i32
    %c0_i32_1 = arith.constant 0 : i32
    return %c0_i32, %c0_i32_0 : i32, i32
  }
  func.func @transform_6(%arg0: i32) -> (i32, i32) {
    %c0_i32 = arith.constant 0 : i32
    %c0_i32_0 = arith.constant 0 : i32
    %c0_i32_1 = arith.constant 0 : i32
    return %c0_i32, %c0_i32_0 : i32, i32
  }
  func.func @transform_7(%arg0: i32) -> (i32, i32) {
    %c0_i32 = arith.constant 0 : i32
    %c0_i32_0 = arith.constant 0 : i32
    %c0_i32_1 = arith.constant 0 : i32
    return %c0_i32, %c0_i32_0 : i32, i32
  }
  func.func @transform_8(%arg0: i32) -> (i32, i32) {
    %c0_i32 = arith.constant 0 : i32
    %c0_i32_0 = arith.constant 0 : i32
    %c0_i32_1 = arith.constant 0 : i32
    return %c0_i32, %c0_i32_0 : i32, i32
  }
  func.func @transform_9(%arg0: i32) -> (i32, i32) {
    %c0_i32 = arith.constant 0 : i32
    %c0_i32_0 = arith.constant 0 : i32
    %c0_i32_1 = arith.constant 0 : i32
    return %c0_i32, %c0_i32_0 : i32, i32
  }
  func.func @transform_10(%arg0: i32) -> (i32, i32) {
    %c0_i32 = arith.constant 0 : i32
    %c0_i32_0 = arith.constant 0 : i32
    %c0_i32_1 = arith.constant 0 : i32
    return %c0_i32, %c0_i32_0 : i32, i32
  }
  func.func @transform_11(%arg0: i32) -> (i32, i32) {
    %c0_i32 = arith.constant 0 : i32
    %c0_i32_0 = arith.constant 0 : i32
    %c0_i32_1 = arith.constant 0 : i32
    return %c0_i32, %c0_i32_0 : i32, i32
  }
  func.func @transform_12(%arg0: i32) -> (i32, i32) {
    %c0_i32 = arith.constant 0 : i32
    %c0_i32_0 = arith.constant 0 : i32
    %c0_i32_1 = arith.constant 0 : i32
    return %c0_i32, %c0_i32_0 : i32, i32
  }
  func.func @transform_13(%arg0: i32) -> (i32, i32) {
    %c0_i32 = arith.constant 0 : i32
    %c0_i32_0 = arith.constant 0 : i32
    %c0_i32_1 = arith.constant 0 : i32
    return %c0_i32, %c0_i32_0 : i32, i32
  }
  func.func @transform_14(%arg0: i32) -> (i32, i32) {
    %c0_i32 = arith.constant 0 : i32
    %c0_i32_0 = arith.constant 0 : i32
    %c0_i32_1 = arith.constant 0 : i32
    return %c0_i32, %c0_i32_0 : i32, i32
  }
  func.func @transform_15(%arg0: i32) -> (i32, i32) {
    %c0_i32 = arith.constant 0 : i32
    %c0_i32_0 = arith.constant 0 : i32
    return %arg0, %c0_i32 : i32, i32
  }
  func.func @transform_16(%arg0: i32) -> (i32, i32) {
    %c0_i32 = arith.constant 0 : i32
    %c0_i32_0 = arith.constant 0 : i32
    return %arg0, %c0_i32 : i32, i32
  }
}

</mosaic_0001>

<llo_original>
// kernel: tpu_custom_call.1
$region0: #{tpu_custom_call.1}
  #allocation0 [shape = 'u32[]', space=smem, size = 0x4, offset = 0x4, fixed_abs, tag = 'smem constant byte address 0x4 - core index']
  #allocation1 [shape = 'u32[72,128]{1,0:T(1,128)}', space=vmem, size = 0x9000, scoped, tag = 'internal scratch']
  %s0 = inlined_call_operand.vmem [shape: f32[32,32], index: 0, kind: input, shape index: {}]
  %s1 = inlined_call_operand.vmem [shape: f32[32,8], index: 1, kind: input, shape index: {}]
  %s2 = inlined_call_operand.hbm [shape: f32[1,32], index: 2, kind: input, shape index: {}]
  %s3 = inlined_call_operand.vmem [shape: bf16[32,32], index: 3, kind: input, shape index: {}]
  %s4 = inlined_call_operand.hbm [shape: f32[1,32], index: 4, kind: input, shape index: {}]
  %s5 = inlined_call_operand.vmem [shape: bf16[32,32], index: 5, kind: input, shape index: {}]
  %s6 = inlined_call_operand.vmem [shape: f32[1,32], index: 6, kind: input, shape index: {}]
  %s7 = inlined_call_operand.vmem [shape: bf16[32,16], index: 7, kind: input, shape index: {}]
  %s8 = inlined_call_operand.vmem [shape: f32[1,16], index: 8, kind: input, shape index: {}]
  %s9 = inlined_call_operand.vmem [shape: bf16[8,32], index: 9, kind: input, shape index: {}]
  %s10 = inlined_call_operand.vmem [shape: f32[1,32], index: 10, kind: input, shape index: {}]
  %s11 = inlined_call_operand.hbm [shape: bf16[32,32], index: 11, kind: input, shape index: {}]
  %s12 = inlined_call_operand.vmem [shape: f32[1,32], index: 12, kind: input, shape index: {}]
  %s13 = inlined_call_operand.hbm [shape: bf16[32,32], index: 13, kind: input, shape index: {}]
  %s14 = inlined_call_operand.vmem [shape: f32[1,32], index: 14, kind: input, shape index: {}]
  %s15 = inlined_call_operand.vmem [shape: f32[32,24], index: 15, kind: output, shape index: {0}]
  %s16 = inlined_call_operand.hbm [shape: f32[32,32], index: 16, kind: output, shape index: {1}]
  %17 = xla_tuple %s15, %s16
  %s18 = sld [smem:[#allocation0]]
  $region117: #{tpu_custom_call.1} parent=0
    _
  %s20 = ssub.s32 1, %s18
  %s21 = scalar_select 0, %s20, %s18
  $region1: #{tpu_custom_call.1} parent=0
    #allocation2 [shape = 'u8[512]{0}', space=vmem, size = 0x400, scoped, tag = 'input window, operand 2, single buffered']
    #allocation3 [shape = 's32[2]{0}', space=sflag, size = 0x8, scoped, tag = 'scoped memory for tpu_custom_call.1']
    #allocation4 [shape = 's32[2]{0}', space=sflag, size = 0x8, scoped, tag = 'scoped memory for tpu_custom_call.1']
    #allocation5 [shape = 'u8[512]{0}', space=vmem, size = 0x400, scoped, tag = 'input window, operand 4, single buffered']
    #allocation6 [shape = 's32[1]{0}', space=sflag, size = 0x4, scoped, tag = 'scoped memory for tpu_custom_call.1']
    #allocation7 [shape = 'u8[8192]{0}', space=vmem, size = 0x2000, scoped, tag = 'input window, operand 11, single buffered']
    #allocation8 [shape = 'u8[8192]{0}', space=vmem, size = 0x2000, scoped, tag = 'input window, operand 13, single buffered']
    #allocation9 [shape = 's32[1]{0}', space=sflag, size = 0x4, scoped, tag = 'scoped memory for tpu_custom_call.1']
    #allocation10 [shape = 'u8[16384]{0}', space=vmem, size = 0x4000, scoped, tag = 'output window, operand 1']
    %22 = vsyncpa [#allocation3], 0
    %23 = vsyncpa [#allocation6], 0
    %24 = vsyncpa [#allocation9], 0
    %25 = vsyncpa [#allocation4], 0
    %s26 = scalar_lea.sflag [#allocation4], 1
    %27 = vsyncpa %s26, 0
    loop: start=0, step=1, limit=4
    $region2: #{tpu_custom_call.1} parent=1 // loop_pre_header
      _
    $region3: #{tpu_custom_call.1} parent=1 // loop_header
      %s29 = sphi 0, %s33
      %p30 = scmp.ge.s32.totalorder %s29, 4
      %s39 = sphi 0, %s41
      %s42 = sphi 0, %s39
      %s43 = sphi 0, %s42
      %s59 = sphi 0, %s43
      %s65 = sphi 0, %s67
      %s68 = sphi 0, %s65
      %s69 = sphi 0, %s68
      %s85 = sphi 0, %s69
      %s89 = sphi 0, %s89
      %s91 = sphi 0, %s89
      %s92 = sphi 0, %s91
      %s106 = sphi 0, %s92
      %s110 = sphi 0, %s110
      %s112 = sphi 0, %s110
      %s113 = sphi 0, %s112
      %s127 = sphi 0, %s113
      %s131 = sphi 0, %s131
      %s133 = sphi 0, %s131
      %s134 = sphi 0, %s133
      %s148 = sphi 0, %s134
      %s152 = sphi 0, %s152
      %s154 = sphi 0, %s152
      %s155 = sphi 0, %s154
      %s169 = sphi 0, %s155
      %s173 = sphi 0, %s173
      %s175 = sphi 0, %s173
      %s176 = sphi 0, %s175
      %s190 = sphi 0, %s176
      %s194 = sphi 0, %s194
      %s196 = sphi 0, %s194
      %s197 = sphi 0, %s196
      %s211 = sphi 0, %s197
      %s215 = sphi 0, %s215
      %s217 = sphi 0, %s215
      %s218 = sphi 0, %s217
      %s232 = sphi 0, %s218
      %s236 = sphi 0, %s236
      %s238 = sphi 0, %s236
      %s239 = sphi 0, %s238
      %s253 = sphi 0, %s239
      %s257 = sphi 0, %s257
      %s259 = sphi 0, %s257
      %s260 = sphi 0, %s259
      %s274 = sphi 0, %s260
      %s278 = sphi 0, %s278
      %s280 = sphi 0, %s278
      %s281 = sphi 0, %s280
      %s295 = sphi 0, %s281
      %s299 = sphi 0, %s299
      %s301 = sphi 0, %s299
      %s302 = sphi 0, %s301
      %s316 = sphi 0, %s302
      %s320 = sphi 0, %s320
      %s322 = sphi 0, %s320
      %s323 = sphi 0, %s322
      %s337 = sphi 0, %s323
      %s341 = sphi 0, %s341
      %s343 = sphi 0, %s341
      %s344 = sphi 0, %s343
      %s358 = sphi 0, %s344
      %s364 = sphi 0, %s366
      %s367 = sphi 0, %s364
      %s368 = sphi 0, %s367
      %s384 = sphi 0, %s368
      %s390 = sphi 0, %s392
      %s393 = sphi 0, %s390
      %s394 = sphi 0, %s393
      %s410 = sphi 0, %s394
    $region4: #{tpu_custom_call.1} parent=1 // loop_header_branch
      %32 = sbr.rel (%p30) target = $region8
    $region5: #{tpu_custom_call.1} parent=1 // loop_body
      %s34 = ssub.s32 %s29, 1
      %s35 = ssub.s32 %s29, 2
      %s36 = sadd.s32 %s29, 1
      %s37 = ssub.s32 %s29, %s36
      %p38 = scmp.eq.s32.totalorder %s37, 0
      %s40 = sadd.s32 %s39, 1
      %s41 = scalar_select %p38, %s39, %s40
      %p44 = pneg %p38
      %p45 = scmp.eq.s32.totalorder %s29, 1
      %p46 = por %p44, %p45
      %p47 = scmp.ne.s32.totalorder %s39, %s42
      %p48 = scmp.eq.s32.totalorder %s29, 0
      %p49 = por %p47, %p48
      %p50 = scmp.ne.s32.totalorder %s39, %s42
      %p51 = scmp.eq.s32.totalorder %s34, 1
      %p52 = por %p50, %p51
      %p53 = scmp.ne.s32.totalorder %s42, %s43
      %p54 = scmp.eq.s32.totalorder %s34, 0
      %p55 = por %p53, %p54
      %p56 = scmp.ne.s32.totalorder %s42, %s43
      %p57 = scmp.eq.s32.totalorder %s35, 1
      %p58 = por %p56, %p57
      %p60 = scmp.ne.s32.totalorder %s43, %s59
      %p61 = scmp.eq.s32.totalorder %s35, 0
      %p62 = por %p60, %p61
      %s63 = ssub.s32 %s29, %s36
      %p64 = scmp.eq.s32.totalorder %s63, 0
      %s66 = sadd.s32 %s65, 1
      %s67 = scalar_select %p64, %s65, %s66
      %p70 = pneg %p64
      %p71 = scmp.eq.s32.totalorder %s29, 1
      %p72 = por %p70, %p71
      %p73 = scmp.ne.s32.totalorder %s65, %s68
      %p74 = scmp.eq.s32.totalorder %s29, 0
      %p75 = por %p73, %p74
      %p76 = scmp.ne.s32.totalorder %s65, %s68
      %p77 = scmp.eq.s32.totalorder %s34, 1
      %p78 = por %p76, %p77
      %p79 = scmp.ne.s32.totalorder %s68, %s69
      %p80 = scmp.eq.s32.totalorder %s34, 0
      %p81 = por %p79, %p80
      %p82 = scmp.ne.s32.totalorder %s68, %s69
      %p83 = scmp.eq.s32.totalorder %s35, 1
      %p84 = por %p82, %p83
      %p86 = scmp.ne.s32.totalorder %s69, %s85
      %p87 = scmp.eq.s32.totalorder %s35, 0
      %p88 = por %p86, %p87
      %s90 = sadd.s32 %s89, 1
      %p93 = scmp.eq.s32.totalorder %s29, 1
      %p94 = scmp.ne.s32.totalorder %s89, %s91
      %p95 = scmp.eq.s32.totalorder %s29, 0
      %p96 = por %p94, %p95
      %p97 = scmp.ne.s32.totalorder %s89, %s91
      %p98 = scmp.eq.s32.totalorder %s34, 1
      %p99 = por %p97, %p98
      %p100 = scmp.ne.s32.totalorder %s91, %s92
      %p101 = scmp.eq.s32.totalorder %s34, 0
      %p102 = por %p100, %p101
      %p103 = scmp.ne.s32.totalorder %s91, %s92
      %p104 = scmp.eq.s32.totalorder %s35, 1
      %p105 = por %p103, %p104
      %p107 = scmp.ne.s32.totalorder %s92, %s106
      %p108 = scmp.eq.s32.totalorder %s35, 0
      %p109 = por %p107, %p108
      %s111 = sadd.s32 %s110, 1
      %p114 = scmp.eq.s32.totalorder %s29, 1
      %p115 = scmp.ne.s32.totalorder %s110, %s112
      %p116 = scmp.eq.s32.totalorder %s29, 0
      %p117 = por %p115, %p116
      %p118 = scmp.ne.s32.totalorder %s110, %s112
      %p119 = scmp.eq.s32.totalorder %s34, 1
      %p120 = por %p118, %p119
      %p121 = scmp.ne.s32.totalorder %s112, %s113
      %p122 = scmp.eq.s32.totalorder %s34, 0
      %p123 = por %p121, %p122
      %p124 = scmp.ne.s32.totalorder %s112, %s113
      %p125 = scmp.eq.s32.totalorder %s35, 1
      %p126 = por %p124, %p125
      %p128 = scmp.ne.s32.totalorder %s113, %s127
      %p129 = scmp.eq.s32.totalorder %s35, 0
      %p130 = por %p128, %p129
      %s132 = sadd.s32 %s131, 1
      %p135 = scmp.eq.s32.totalorder %s29, 1
      %p136 = scmp.ne.s32.totalorder %s131, %s133
      %p137 = scmp.eq.s32.totalorder %s29, 0
      %p138 = por %p136, %p137
      %p139 = scmp.ne.s32.totalorder %s131, %s133
      %p140 = scmp.eq.s32.totalorder %s34, 1
      %p141 = por %p139, %p140
      %p142 = scmp.ne.s32.totalorder %s133, %s134
      %p143 = scmp.eq.s32.totalorder %s34, 0
      %p144 = por %p142, %p143
      %p145 = scmp.ne.s32.totalorder %s133, %s134
      %p146 = scmp.eq.s32.totalorder %s35, 1
      %p147 = por %p145, %p146
      %p149 = scmp.ne.s32.totalorder %s134, %s148
      %p150 = scmp.eq.s32.totalorder %s35, 0
      %p151 = por %p149, %p150
      %s153 = sadd.s32 %s152, 1
      %p156 = scmp.eq.s32.totalorder %s29, 1
      %p157 = scmp.ne.s32.totalorder %s152, %s154
      %p158 = scmp.eq.s32.totalorder %s29, 0
      %p159 = por %p157, %p158
      %p160 = scmp.ne.s32.totalorder %s152, %s154
      %p161 = scmp.eq.s32.totalorder %s34, 1
      %p162 = por %p160, %p161
      %p163 = scmp.ne.s32.totalorder %s154, %s155
      %p164 = scmp.eq.s32.totalorder %s34, 0
      %p165 = por %p163, %p164
      %p166 = scmp.ne.s32.totalorder %s154, %s155
      %p167 = scmp.eq.s32.totalorder %s35, 1
      %p168 = por %p166, %p167
      %p170 = scmp.ne.s32.totalorder %s155, %s169
      %p171 = scmp.eq.s32.totalorder %s35, 0
      %p172 = por %p170, %p171
      %s174 = sadd.s32 %s173, 1
      %p177 = scmp.eq.s32.totalorder %s29, 1
      %p178 = scmp.ne.s32.totalorder %s173, %s175
      %p179 = scmp.eq.s32.totalorder %s29, 0
      %p180 = por %p178, %p179
      %p181 = scmp.ne.s32.totalorder %s173, %s175
      %p182 = scmp.eq.s32.totalorder %s34, 1
      %p183 = por %p181, %p182
      %p184 = scmp.ne.s32.totalorder %s175, %s176
      %p185 = scmp.eq.s32.totalorder %s34, 0
      %p186 = por %p184, %p185
      %p187 = scmp.ne.s32.totalorder %s175, %s176
      %p188 = scmp.eq.s32.totalorder %s35, 1
      %p189 = por %p187, %p188
      %p191 = scmp.ne.s32.totalorder %s176, %s190
      %p192 = scmp.eq.s32.totalorder %s35, 0
      %p193 = por %p191, %p192
      %s195 = sadd.s32 %s194, 1
      %p198 = scmp.eq.s32.totalorder %s29, 1
      %p199 = scmp.ne.s32.totalorder %s194, %s196
      %p200 = scmp.eq.s32.totalorder %s29, 0
      %p201 = por %p199, %p200
      %p202 = scmp.ne.s32.totalorder %s194, %s196
      %p203 = scmp.eq.s32.totalorder %s34, 1
      %p204 = por %p202, %p203
      %p205 = scmp.ne.s32.totalorder %s196, %s197
      %p206 = scmp.eq.s32.totalorder %s34, 0
      %p207 = por %p205, %p206
      %p208 = scmp.ne.s32.totalorder %s196, %s197
      %p209 = scmp.eq.s32.totalorder %s35, 1
      %p210 = por %p208, %p209
      %p212 = scmp.ne.s32.totalorder %s197, %s211
      %p213 = scmp.eq.s32.totalorder %s35, 0
      %p214 = por %p212, %p213
      %s216 = sadd.s32 %s215, 1
      %p219 = scmp.eq.s32.totalorder %s29, 1
      %p220 = scmp.ne.s32.totalorder %s215, %s217
      %p221 = scmp.eq.s32.totalorder %s29, 0
      %p222 = por %p220, %p221
      %p223 = scmp.ne.s32.totalorder %s215, %s217
      %p224 = scmp.eq.s32.totalorder %s34, 1
      %p225 = por %p223, %p224
      %p226 = scmp.ne.s32.totalorder %s217, %s218
      %p227 = scmp.eq.s32.totalorder %s34, 0
      %p228 = por %p226, %p227
      %p229 = scmp.ne.s32.totalorder %s217, %s218
      %p230 = scmp.eq.s32.totalorder %s35, 1
      %p231 = por %p229, %p230
      %p233 = scmp.ne.s32.totalorder %s218, %s232
      %p234 = scmp.eq.s32.totalorder %s35, 0
      %p235 = por %p233, %p234
      %s237 = sadd.s32 %s236, 1
      %p240 = scmp.eq.s32.totalorder %s29, 1
      %p241 = scmp.ne.s32.totalorder %s236, %s238
      %p242 = scmp.eq.s32.totalorder %s29, 0
      %p243 = por %p241, %p242
      %p244 = scmp.ne.s32.totalorder %s236, %s238
      %p245 = scmp.eq.s32.totalorder %s34, 1
      %p246 = por %p244, %p245
      %p247 = scmp.ne.s32.totalorder %s238, %s239
      %p248 = scmp.eq.s32.totalorder %s34, 0
      %p249 = por %p247, %p248
      %p250 = scmp.ne.s32.totalorder %s238, %s239
      %p251 = scmp.eq.s32.totalorder %s35, 1
      %p252 = por %p250, %p251
      %p254 = scmp.ne.s32.totalorder %s239, %s253
      %p255 = scmp.eq.s32.totalorder %s35, 0
      %p256 = por %p254, %p255
      %s258 = sadd.s32 %s257, 1
      %p261 = scmp.eq.s32.totalorder %s29, 1
      %p262 = scmp.ne.s32.totalorder %s257, %s259
      %p263 = scmp.eq.s32.totalorder %s29, 0
      %p264 = por %p262, %p263
      %p265 = scmp.ne.s32.totalorder %s257, %s259
      %p266 = scmp.eq.s32.totalorder %s34, 1
      %p267 = por %p265, %p266
      %p268 = scmp.ne.s32.totalorder %s259, %s260
      %p269 = scmp.eq.s32.totalorder %s34, 0
      %p270 = por %p268, %p269
      %p271 = scmp.ne.s32.totalorder %s259, %s260
      %p272 = scmp.eq.s32.totalorder %s35, 1
      %p273 = por %p271, %p272
      %p275 = scmp.ne.s32.totalorder %s260, %s274
      %p276 = scmp.eq.s32.totalorder %s35, 0
      %p277 = por %p275, %p276
      %s279 = sadd.s32 %s278, 1
      %p282 = scmp.eq.s32.totalorder %s29, 1
      %p283 = scmp.ne.s32.totalorder %s278, %s280
      %p284 = scmp.eq.s32.totalorder %s29, 0
      %p285 = por %p283, %p284
      %p286 = scmp.ne.s32.totalorder %s278, %s280
      %p287 = scmp.eq.s32.totalorder %s34, 1
      %p288 = por %p286, %p287
      %p289 = scmp.ne.s32.totalorder %s280, %s281
      %p290 = scmp.eq.s32.totalorder %s34, 0
      %p291 = por %p289, %p290
      %p292 = scmp.ne.s32.totalorder %s280, %s281
      %p293 = scmp.eq.s32.totalorder %s35, 1
      %p294 = por %p292, %p293
      %p296 = scmp.ne.s32.totalorder %s281, %s295
      %p297 = scmp.eq.s32.totalorder %s35, 0
      %p298 = por %p296, %p297
      %s300 = sadd.s32 %s299, 1
      %p303 = scmp.eq.s32.totalorder %s29, 1
      %p304 = scmp.ne.s32.totalorder %s299, %s301
      %p305 = scmp.eq.s32.totalorder %s29, 0
      %p306 = por %p304, %p305
      %p307 = scmp.ne.s32.totalorder %s299, %s301
      %p308 = scmp.eq.s32.totalorder %s34, 1
      %p309 = por %p307, %p308
      %p310 = scmp.ne.s32.totalorder %s301, %s302
      %p311 = scmp.eq.s32.totalorder %s34, 0
      %p312 = por %p310, %p311
      %p313 = scmp.ne.s32.totalorder %s301, %s302
      %p314 = scmp.eq.s32.totalorder %s35, 1
      %p315 = por %p313, %p314
      %p317 = scmp.ne.s32.totalorder %s302, %s316
      %p318 = scmp.eq.s32.totalorder %s35, 0
      %p319 = por %p317, %p318
      %s321 = sadd.s32 %s320, 1
      %p324 = scmp.eq.s32.totalorder %s29, 1
      %p325 = scmp.ne.s32.totalorder %s320, %s322
      %p326 = scmp.eq.s32.totalorder %s29, 0
      %p327 = por %p325, %p326
      %p328 = scmp.ne.s32.totalorder %s320, %s322
      %p329 = scmp.eq.s32.totalorder %s34, 1
      %p330 = por %p328, %p329
      %p331 = scmp.ne.s32.totalorder %s322, %s323
      %p332 = scmp.eq.s32.totalorder %s34, 0
      %p333 = por %p331, %p332
      %p334 = scmp.ne.s32.totalorder %s322, %s323
      %p335 = scmp.eq.s32.totalorder %s35, 1
      %p336 = por %p334, %p335
      %p338 = scmp.ne.s32.totalorder %s323, %s337
      %p339 = scmp.eq.s32.totalorder %s35, 0
      %p340 = por %p338, %p339
      %s342 = sadd.s32 %s341, 1
      %p345 = scmp.eq.s32.totalorder %s29, 1
      %p346 = scmp.ne.s32.totalorder %s341, %s343
      %p347 = scmp.eq.s32.totalorder %s29, 0
      %p348 = por %p346, %p347
      %p349 = scmp.ne.s32.totalorder %s341, %s343
      %p350 = scmp.eq.s32.totalorder %s34, 1
      %p351 = por %p349, %p350
      %p352 = scmp.ne.s32.totalorder %s343, %s344
      %p353 = scmp.eq.s32.totalorder %s34, 0
      %p354 = por %p352, %p353
      %p355 = scmp.ne.s32.totalorder %s343, %s344
      %p356 = scmp.eq.s32.totalorder %s35, 1
      %p357 = por %p355, %p356
      %p359 = scmp.ne.s32.totalorder %s344, %s358
      %p360 = scmp.eq.s32.totalorder %s35, 0
      %p361 = por %p359, %p360
      %s362 = ssub.s32 %s29, %s36
      %p363 = scmp.eq.s32.totalorder %s362, 0
      %s365 = sadd.s32 %s364, 1
      %s366 = scalar_select %p363, %s364, %s365
      %p369 = pneg %p363
      %p370 = scmp.eq.s32.totalorder %s29, 1
      %p371 = por %p369, %p370
      %p372 = scmp.ne.s32.totalorder %s364, %s367
      %p373 = scmp.eq.s32.totalorder %s29, 0
      %p374 = por %p372, %p373
      %p375 = scmp.ne.s32.totalorder %s364, %s367
      %p376 = scmp.eq.s32.totalorder %s34, 1
      %p377 = por %p375, %p376
      %p378 = scmp.ne.s32.totalorder %s367, %s368
      %p379 = scmp.eq.s32.totalorder %s34, 0
      %p380 = por %p378, %p379
      %p381 = scmp.ne.s32.totalorder %s367, %s368
      %p382 = scmp.eq.s32.totalorder %s35, 1
      %p383 = por %p381, %p382
      %p385 = scmp.ne.s32.totalorder %s368, %s384
      %p386 = scmp.eq.s32.totalorder %s35, 0
      %p387 = por %p385, %p386
      %s388 = ssub.s32 %s29, %s36
      %p389 = scmp.eq.s32.totalorder %s388, 0
      %s391 = sadd.s32 %s390, 1
      %s392 = scalar_select %p389, %s390, %s391
      %p395 = pneg %p389
      %p396 = scmp.eq.s32.totalorder %s29, 1
      %p397 = por %p395, %p396
      %p398 = scmp.ne.s32.totalorder %s390, %s393
      %p399 = scmp.eq.s32.totalorder %s29, 0
      %p400 = por %p398, %p399
      %p401 = scmp.ne.s32.totalorder %s390, %s393
      %p402 = scmp.eq.s32.totalorder %s34, 1
      %p403 = por %p401, %p402
      %p404 = scmp.ne.s32.totalorder %s393, %s394
      %p405 = scmp.eq.s32.totalorder %s34, 0
      %p406 = por %p404, %p405
      %p407 = scmp.ne.s32.totalorder %s393, %s394
      %p408 = scmp.eq.s32.totalorder %s35, 1
      %p409 = por %p407, %p408
      %p411 = scmp.ne.s32.totalorder %s394, %s410
      %p412 = scmp.eq.s32.totalorder %s35, 0
      %p413 = por %p411, %p412
      %p414 = scmp.le.s32.totalorder 1, %s29
      %p415 = scmp.lt.s32.totalorder %s29, 3
      %p416 = pnand %p414, %p415
      %p417 = pneg %p416
      // Predicated region
      $region9: #{tpu_custom_call.1} parent=5 // pred_check
        _
      $region10: #{tpu_custom_call.1} parent=5 // pred_check_branch
        %419 = sbr.rel (%p416) target = $region12
      $region11: #{tpu_custom_call.1} parent=5 // pred_region
        %s420 = ssub.s32 %s29, 1
        // Predicated region
        $region13: #{tpu_custom_call.1} parent=11 // pred_check
          %p421 = pneg %p102
        $region14: #{tpu_custom_call.1} parent=11 // pred_check_branch
          %423 = sbr.rel (%p421) target = $region16
        $region15: #{tpu_custom_call.1} parent=11 // pred_region
          %425 = vsyncadd [#allocation3], 0
          %s427 = sshll.u32 %s2, 4
          %s428 = int_to_ptr.hbm [resolvable:$true] %s427
          %s429 = sshll.u32 [#allocation2], 4
          %s430 = int_to_ptr.vmem [resolvable:$true] %s429
          %432 = dma.hbm_to_vmem [thread:$0]  %s428, 16, %s430, [#allocation3]
        $region16: #{tpu_custom_call.1} parent=11 // pred_fallthru
          _
        // Predicated region
        $region17: #{tpu_custom_call.1} parent=11 // pred_check
          %p433 = pneg %p123
        $region18: #{tpu_custom_call.1} parent=11 // pred_check_branch
          %435 = sbr.rel (%p433) target = $region20
        $region19: #{tpu_custom_call.1} parent=11 // pred_region
          _
        $region20: #{tpu_custom_call.1} parent=11 // pred_fallthru
          _
        // Predicated region
        $region21: #{tpu_custom_call.1} parent=11 // pred_check
          %p436 = pneg %p144
        $region22: #{tpu_custom_call.1} parent=11 // pred_check_branch
          %438 = sbr.rel (%p436) target = $region24
        $region23: #{tpu_custom_call.1} parent=11 // pred_region
          %440 = vsyncadd [#allocation6], 0
          %s442 = sshll.u32 %s4, 4
          %s443 = int_to_ptr.hbm [resolvable:$true] %s442
          %s444 = sshll.u32 [#allocation5], 4
          %s445 = int_to_ptr.vmem [resolvable:$true] %s444
          %447 = dma.hbm_to_vmem [thread:$0]  %s443, 16, %s445, [#allocation6]
        $region24: #{tpu_custom_call.1} parent=11 // pred_fallthru
          _
        // Predicated region
        $region25: #{tpu_custom_call.1} parent=11 // pred_check
          %p448 = pneg %p165
        $region26: #{tpu_custom_call.1} parent=11 // pred_check_branch
          %450 = sbr.rel (%p448) target = $region28
        $region27: #{tpu_custom_call.1} parent=11 // pred_region
          _
        $region28: #{tpu_custom_call.1} parent=11 // pred_fallthru
          _
        // Predicated region
        $region29: #{tpu_custom_call.1} parent=11 // pred_check
          %p451 = pneg %p186
        $region30: #{tpu_custom_call.1} parent=11 // pred_check_branch
          %453 = sbr.rel (%p451) target = $region32
        $region31: #{tpu_custom_call.1} parent=11 // pred_region
          _
        $region32: #{tpu_custom_call.1} parent=11 // pred_fallthru
          _
        // Predicated region
        $region33: #{tpu_custom_call.1} parent=11 // pred_check
          %p454 = pneg %p207
        $region34: #{tpu_custom_call.1} parent=11 // pred_check_branch
          %456 = sbr.rel (%p454) target = $region36
        $region35: #{tpu_custom_call.1} parent=11 // pred_region
          _
        $region36: #{tpu_custom_call.1} parent=11 // pred_fallthru
          _
        // Predicated region
        $region37: #{tpu_custom_call.1} parent=11 // pred_check
          %p457 = pneg %p228
        $region38: #{tpu_custom_call.1} parent=11 // pred_check_branch
          %459 = sbr.rel (%p457) target = $region40
        $region39: #{tpu_custom_call.1} parent=11 // pred_region
          _
        $region40: #{tpu_custom_call.1} parent=11 // pred_fallthru
          _
        // Predicated region
        $region41: #{tpu_custom_call.1} parent=11 // pred_check
          %p460 = pneg %p249
        $region42: #{tpu_custom_call.1} parent=11 // pred_check_branch
          %462 = sbr.rel (%p460) target = $region44
        $region43: #{tpu_custom_call.1} parent=11 // pred_region
          _
        $region44: #{tpu_custom_call.1} parent=11 // pred_fallthru
          _
        // Predicated region
        $region45: #{tpu_custom_call.1} parent=11 // pred_check
          %p463 = pneg %p270
        $region46: #{tpu_custom_call.1} parent=11 // pred_check_branch
          %465 = sbr.rel (%p463) target = $region48
        $region47: #{tpu_custom_call.1} parent=11 // pred_region
          _
        $region48: #{tpu_custom_call.1} parent=11 // pred_fallthru
          _
        // Predicated region
        $region49: #{tpu_custom_call.1} parent=11 // pred_check
          %p466 = pneg %p291
        $region50: #{tpu_custom_call.1} parent=11 // pred_check_branch
          %468 = sbr.rel (%p466) target = $region52
        $region51: #{tpu_custom_call.1} parent=11 // pred_region
          %470 = vsyncadd [#allocation6], 0
          %s471 = sshll.u32 %s11, 4
          %s472 = int_to_ptr.hbm [resolvable:$true] %s471
          %s473 = sshll.u32 [#allocation7], 4
          %s474 = int_to_ptr.vmem [resolvable:$true] %s473
          %479 = dma.hbm_to_vmem [thread:$0]  %s472, 256, %s474, [#allocation6], 64, 64, 4
        $region52: #{tpu_custom_call.1} parent=11 // pred_fallthru
          _
        // Predicated region
        $region53: #{tpu_custom_call.1} parent=11 // pred_check
          %p480 = pneg %p312
        $region54: #{tpu_custom_call.1} parent=11 // pred_check_branch
          %482 = sbr.rel (%p480) target = $region56
        $region55: #{tpu_custom_call.1} parent=11 // pred_region
          _
        $region56: #{tpu_custom_call.1} parent=11 // pred_fallthru
          _
        // Predicated region
        $region57: #{tpu_custom_call.1} parent=11 // pred_check
          %p483 = pneg %p333
        $region58: #{tpu_custom_call.1} parent=11 // pred_check_branch
          %485 = sbr.rel (%p483) target = $region60
        $region59: #{tpu_custom_call.1} parent=11 // pred_region
          %487 = vsyncadd [#allocation9], 0
          %s488 = sshll.u32 %s13, 4
          %s489 = int_to_ptr.hbm [resolvable:$true] %s488
          %s490 = sshll.u32 [#allocation8], 4
          %s491 = int_to_ptr.vmem [resolvable:$true] %s490
          %496 = dma.hbm_to_vmem [thread:$0]  %s489, 256, %s491, [#allocation9], 64, 64, 4
        $region60: #{tpu_custom_call.1} parent=11 // pred_fallthru
          _
        // Predicated region
        $region61: #{tpu_custom_call.1} parent=11 // pred_check
          %p497 = pneg %p354
        $region62: #{tpu_custom_call.1} parent=11 // pred_check_branch
          %499 = sbr.rel (%p497) target = $region64
        $region63: #{tpu_custom_call.1} parent=11 // pred_region
          _
        $region64: #{tpu_custom_call.1} parent=11 // pred_fallthru
          _
      $region12: #{tpu_custom_call.1} parent=5 // pred_fallthru
        _
      %p500 = scmp.lt.s32.totalorder %s29, 2
      // Predicated region
      $region65: #{tpu_custom_call.1} parent=5 // pred_check
        %p501 = pneg %p500
      $region66: #{tpu_custom_call.1} parent=5 // pred_check_branch
        %503 = sbr.rel (%p501) target = $region68
      $region67: #{tpu_custom_call.1} parent=5 // pred_region
        // Predicated region
        $region69: #{tpu_custom_call.1} parent=67 // pred_check
          %p504 = pneg %p49
        $region70: #{tpu_custom_call.1} parent=67 // pred_check_branch
          %506 = sbr.rel (%p504) target = $region72
        $region71: #{tpu_custom_call.1} parent=67 // pred_region
          %s507 = smul.u32 2, %s29
          %p508 = scmp.lt.s32.totalorder %s507, 3
          %s509 = scalar_select %p508, %s507, 3
          %s510 = smul.addr %s509, 8
          %s511 = scalar_lea.vmem %s0, %s510
          %s512 = smul.u32 2, %s29
        $region72: #{tpu_custom_call.1} parent=67 // pred_fallthru
          _
        // Predicated region
        $region73: #{tpu_custom_call.1} parent=67 // pred_check
          %p513 = pneg %p75
        $region74: #{tpu_custom_call.1} parent=67 // pred_check_branch
          %515 = sbr.rel (%p513) target = $region76
        $region75: #{tpu_custom_call.1} parent=67 // pred_region
          %s516 = smul.u32 2, %s29
          %p517 = scmp.lt.s32.totalorder %s516, 3
          %s518 = scalar_select %p517, %s516, 3
          %s519 = smul.addr %s518, 8
          %s520 = scalar_lea.vmem %s1, %s519
          %s521 = smul.u32 2, %s29
        $region76: #{tpu_custom_call.1} parent=67 // pred_fallthru
          _
      $region68: #{tpu_custom_call.1} parent=5 // pred_fallthru
        _
      %p522 = scmp.le.s32.totalorder 1, %s29
      %p523 = scmp.lt.s32.totalorder %s29, 3
      %p524 = pnand %p522, %p523
      %p525 = pneg %p524
      // Predicated region
      $region77: #{tpu_custom_call.1} parent=5 // pred_check
        _
      $region78: #{tpu_custom_call.1} parent=5 // pred_check_branch
        %527 = sbr.rel (%p524) target = $region80
      $region79: #{tpu_custom_call.1} parent=5 // pred_region
        %s528 = ssub.s32 %s29, 1
        // Predicated region
        $region81: #{tpu_custom_call.1} parent=79 // pred_check
          %p529 = pneg %p102
        $region82: #{tpu_custom_call.1} parent=79 // pred_check_branch
          %531 = sbr.rel (%p529) target = $region84
        $region83: #{tpu_custom_call.1} parent=79 // pred_region
          %533 = dma.done [#allocation3], 16
        $region84: #{tpu_custom_call.1} parent=79 // pred_fallthru
          _
        // Predicated region
        $region85: #{tpu_custom_call.1} parent=79 // pred_check
          %p534 = pneg %p144
        $region86: #{tpu_custom_call.1} parent=79 // pred_check_branch
          %536 = sbr.rel (%p534) target = $region88
        $region87: #{tpu_custom_call.1} parent=79 // pred_region
          %538 = dma.done [#allocation6], 16
        $region88: #{tpu_custom_call.1} parent=79 // pred_fallthru
          _
        // Predicated region
        $region89: #{tpu_custom_call.1} parent=79 // pred_check
          %p539 = pneg %p291
        $region90: #{tpu_custom_call.1} parent=79 // pred_check_branch
          %541 = sbr.rel (%p539) target = $region92
        $region91: #{tpu_custom_call.1} parent=79 // pred_region
          %543 = dma.done [#allocation6], 256
        $region92: #{tpu_custom_call.1} parent=79 // pred_fallthru
          _
        // Predicated region
        $region93: #{tpu_custom_call.1} parent=79 // pred_check
          %p544 = pneg %p333
        $region94: #{tpu_custom_call.1} parent=79 // pred_check_branch
          %546 = sbr.rel (%p544) target = $region96
        $region95: #{tpu_custom_call.1} parent=79 // pred_region
          %548 = dma.done [#allocation9], 256
        $region96: #{tpu_custom_call.1} parent=79 // pred_fallthru
          _
        %s549 = smul.u32 2, %s34
        %p550 = scmp.lt.s32.totalorder %s549, 3
        %s551 = scalar_select %p550, %s549, 3
        %s552 = smul.addr %s551, 8
        %s553 = scalar_lea.vmem %s0, %s552
        %p554 = pneg %p55
        %p555 = pneg %p52
        %s556 = smul.u32 2, %s34
        %p557 = scmp.lt.s32.totalorder %s556, 3
        %s558 = scalar_select %p557, %s556, 3
        %s559 = smul.addr %s558, 8
        %s560 = scalar_lea.vmem %s1, %s559
        %p561 = pneg %p81
        %p562 = pneg %p78
        %p563 = pneg %p102
        %p564 = pneg %p99
        %p565 = pneg %p123
        %p566 = pneg %p120
        %p567 = pneg %p144
        %p568 = pneg %p141
        %p569 = pneg %p165
        %p570 = pneg %p162
        %p571 = pneg %p186
        %p572 = pneg %p183
        %p573 = pneg %p207
        %p574 = pneg %p204
        %p575 = pneg %p228
        %p576 = pneg %p225
        %p577 = pneg %p249
        %p578 = pneg %p246
        %p579 = pneg %p270
        %p580 = pneg %p267
        %p581 = pneg %p291
        %p582 = pneg %p288
        %p583 = pneg %p312
        %p584 = pneg %p309
        %p585 = pneg %p333
        %p586 = pneg %p330
        %p587 = pneg %p354
        %p588 = pneg %p351
        %p589 = pneg %p380
        %p590 = pneg %p377
        %s591 = smul.u32 2, %s34
        %p592 = scmp.lt.s32.totalorder %s591, 3
        %s593 = scalar_select %p592, %s591, 3
        %s594 = smul.addr %s593, 8
        %s595 = scalar_lea.vmem %s15, %s594
        %p596 = pneg %p406
        %p597 = pneg %p403
        %s598 = sand.u32 %s393, 1
        %s599 = scalar_lea.sflag [#allocation4], %s598
        %s600 = sand.u32 %s393, 1
        %s601 = smul.addr %s600, 16
        %s602 = scalar_lea.vmem [#allocation10], %s601
        %s603 = smul.u32 2, %s34
        %p604 = scmp.lt.s32.totalorder %s603, 3
        %s605 = scalar_select %p604, %s603, 3
        %s606 = smul.addr %s605, 8
        %s607 = scalar_lea.vmem %s0, %s606
        %s608 = smul.u32 2, %s34
        %s609 = smul.u32 2, %s34
        %p610 = scmp.lt.s32.totalorder %s609, 3
        %s611 = scalar_select %p610, %s609, 3
        %s612 = smul.addr %s611, 8
        %s613 = scalar_lea.vmem %s1, %s612
        %s614 = smul.u32 2, %s34
        %s615 = smul.u32 2, %s34
        %p616 = scmp.lt.s32.totalorder %s615, 3
        %s617 = scalar_select %p616, %s615, 3
        %s618 = smul.addr %s617, 8
        %s619 = scalar_lea.vmem %s15, %s618
        %s620 = smul.u32 2, %s34
        %s621 = smul.u32 2, %s34
        %v623 = vld [vmem:[%s607] sm:$0xff]
        %v624 = vld [vmem:[%s607 + $0x8] sm:$0xff]
        %v625 = vpack.c.bf16 %v624, %v623
        %v626 = vld [vmem:[%s3] sm:$0xf]
        %v627 = vld [vmem:[%s3 + $0x4] sm:$0xf]
        %v628 = vld [vmem:[%s3 + $0x8] sm:$0xf]
        %v629 = vld [vmem:[%s3 + $0xc] sm:$0xf]
        %v630 = vld [vmem:[#allocation5] sm:$0x1]
        %v632 = vperm.slane %v630, 0
        %v638 = vunpack.c.l.b16 %v626
        %v639 = vunpack.c.l.b16 %v627
        %v640 = vunpack.c.l.b16 %v628
        %v641 = vunpack.c.l.b16 %v629
        %v642 = vpack.c.b16 %v639, %v638
        %v643 = vpack.c.b16 %v641, %v640
        %vm646 = vcmask 261120
        %v648 = vsel %vm646, %v625, 0
        %650 = vmatpush.bf16.msra.mxu0 0
        %651 = vmatpush.bf16.msra.mxu0 0
        %652 = vmatpush.bf16.msra.mxu0 0
        %653 = vmatpush.bf16.msra.mxu0 0
        %654 = vmatpush.bf16.msra.mxu0 0
        %655 = vmatpush.bf16.msra.mxu0 0
        %656 = vmatpush.bf16.msra.mxu0 %v643
        %657 = vmatpush.bf16.msra.mxu0 %v642
        %658 = vmatmul.bf16.gmra.mxu0 %v648
        %v659 = vpop.f32.mrf.mxu0
        %v660 = vadd.f32 %v632, %v659
        %v661 = vpop.f32.mrf.mxu0
        %v662 = vadd.f32 %v632, %v661
        %663 = vdwg.mxu0
        %v664 = vsel %vm646, %v660, 0.0
        %665 = vadd.xlane.f32.xlu0 %v664
        %v666 = vpop.xlane.xlu0 %665
        %v667 = vsel %vm646, %v662, 0.0
        %668 = vadd.xlane.f32.xlu0 %v667
        %v669 = vpop.xlane.xlu0 %668
        %v670 = vrcp.pop 32.0
        %v671 = vmul.f32 32.0, %v670
        %v672 = vsub.f32 1.0, %v671
        %v673 = vmul.f32 %v670, %v672
        %v674 = vadd.f32 %v670, %v673
        %vm675 = vweird.f32 %v670
        %v676 = vsel %vm675, %v670, %v674
        %v677 = vmul.f32 %v666, %v676
        %v678 = vmul.f32 %v669, %v676
        %v679 = vsub.f32 %v660, %v677
        %v680 = vsub.f32 %v662, %v678
        %v681 = vmul.f32 %v679, %v679
        %v682 = vmul.f32 %v680, %v680
        %v683 = vsel %vm646, %v681, 0.0
        %684 = vadd.xlane.f32.xlu0 %v683
        %v685 = vpop.xlane.xlu0 %684
        %v686 = vsel %vm646, %v682, 0.0
        %687 = vadd.xlane.f32.xlu0 %v686
        %v688 = vpop.xlane.xlu0 %687
        %v689 = vmul.f32 %v685, %v676
        %v690 = vmul.f32 %v688, %v676
        %v691 = vadd.f32 %v689, 1e-05
        %v692 = vadd.f32 %v690, 1e-05
        %v693 = vrsqrt.pop %v691
        %v694 = vmul.f32 %v693, %v691
        %v695 = vmul.f32 %v694, %v693
        %v696 = vmul.f32 0.5, %v695
        %v697 = vsub.f32 1.5, %v696
        %v698 = vmul.f32 %v693, %v697
        %vm699 = vweird.f32 %v691
        %vm700 = vweird.f32 %v693
        %vm701 = vmor %vm699, %vm700
        %v702 = vsel %vm701, %v693, %v698
        %v703 = vrsqrt.pop %v692
        %v704 = vmul.f32 %v703, %v692
        %v705 = vmul.f32 %v704, %v703
        %v706 = vmul.f32 0.5, %v705
        %v707 = vsub.f32 1.5, %v706
        %v708 = vmul.f32 %v703, %v707
        %vm709 = vweird.f32 %v692
        %vm710 = vweird.f32 %v703
        %vm711 = vmor %vm709, %vm710
        %v712 = vsel %vm711, %v703, %v708
        %v713 = vmul.f32 %v679, %v702
        %v714 = vmul.f32 %v680, %v712
        %v715 = vmax.f32 %v713, 0.0
        %v716 = vmax.f32 %v714, 0.0
        %v717 = vpack.c.bf16 %v716, %v715
        %v718 = vld [vmem:[%s5] sm:$0xf]
        %v719 = vld [vmem:[%s5 + $0x4] sm:$0xf]
        %v720 = vld [vmem:[%s5 + $0x8] sm:$0xf]
        %v721 = vld [vmem:[%s5 + $0xc] sm:$0xf]
        %v722 = vld [vmem:[%s6] sm:$0x1]
        %v724 = vperm.slane %v722, 0
        %v730 = vunpack.c.l.b16 %v718
        %v731 = vunpack.c.l.b16 %v719
        %v732 = vunpack.c.l.b16 %v720
        %v733 = vunpack.c.l.b16 %v721
        %v734 = vpack.c.b16 %v731, %v730
        %v735 = vpack.c.b16 %v733, %v732
        %v739 = vsel %vm646, %v717, 0
        %741 = vmatpush.bf16.msra.mxu0 0
        %742 = vmatpush.bf16.msra.mxu0 0
        %743 = vmatpush.bf16.msra.mxu0 0
        %744 = vmatpush.bf16.msra.mxu0 0
        %745 = vmatpush.bf16.msra.mxu0 0
        %746 = vmatpush.bf16.msra.mxu0 0
        %747 = vmatpush.bf16.msra.mxu0 %v735
        %748 = vmatpush.bf16.msra.mxu0 %v734
        %749 = vmatmul.bf16.gmra.mxu0 %v739
        %v750 = vpop.f32.mrf.mxu0
        %v751 = vadd.f32 %v724, %v750
        %v752 = vpop.f32.mrf.mxu0
        %v753 = vadd.f32 %v724, %v752
        %754 = vdwg.mxu0
        %v755 = vsel %vm646, %v751, 0.0
        %756 = vadd.xlane.f32.xlu0 %v755
        %v757 = vpop.xlane.xlu0 %756
        %v758 = vsel %vm646, %v753, 0.0
        %759 = vadd.xlane.f32.xlu0 %v758
        %v760 = vpop.xlane.xlu0 %759
        %v761 = vmul.f32 %v757, %v676
        %v762 = vmul.f32 %v760, %v676
        %v763 = vsub.f32 %v751, %v761
        %v764 = vsub.f32 %v753, %v762
        %v765 = vmul.f32 %v763, %v763
        %v766 = vmul.f32 %v764, %v764
        %v767 = vsel %vm646, %v765, 0.0
        %768 = vadd.xlane.f32.xlu0 %v767
        %v769 = vpop.xlane.xlu0 %768
        %v770 = vsel %vm646, %v766, 0.0
        %771 = vadd.xlane.f32.xlu0 %v770
        %v772 = vpop.xlane.xlu0 %771
        %v773 = vmul.f32 %v769, %v676
        %v774 = vmul.f32 %v772, %v676
        %v775 = vadd.f32 %v773, 1e-05
        %v776 = vadd.f32 %v774, 1e-05
        %v777 = vrsqrt.pop %v775
        %v778 = vmul.f32 %v777, %v775
        %v779 = vmul.f32 %v778, %v777
        %v780 = vmul.f32 0.5, %v779
        %v781 = vsub.f32 1.5, %v780
        %v782 = vmul.f32 %v777, %v781
        %vm783 = vweird.f32 %v775
        %vm784 = vweird.f32 %v777
        %vm785 = vmor %vm783, %vm784
        %v786 = vsel %vm785, %v777, %v782
        %v787 = vrsqrt.pop %v776
        %v788 = vmul.f32 %v787, %v776
        %v789 = vmul.f32 %v788, %v787
        %v790 = vmul.f32 0.5, %v789
        %v791 = vsub.f32 1.5, %v790
        %v792 = vmul.f32 %v787, %v791
        %vm793 = vweird.f32 %v776
        %vm794 = vweird.f32 %v787
        %vm795 = vmor %vm793, %vm794
        %v796 = vsel %vm795, %v787, %v792
        %v797 = vmul.f32 %v763, %v786
        %v798 = vmul.f32 %v764, %v796
        %v799 = vmax.f32 %v797, 0.0
        %v800 = vmax.f32 %v798, 0.0
        %v801 = vpack.c.bf16 %v800, %v799
        %v802 = vld [vmem:[%s7] sm:$0xf]
        %v803 = vld [vmem:[%s7 + $0x4] sm:$0xf]
        %v804 = vld [vmem:[%s7 + $0x8] sm:$0xf]
        %v805 = vld [vmem:[%s7 + $0xc] sm:$0xf]
        %v806 = vld [vmem:[%s8] sm:$0x1]
        %v808 = vperm.slane %v806, 0
        %v814 = vunpack.c.l.b16 %v802
        %v815 = vunpack.c.l.b16 %v803
        %v816 = vunpack.c.l.b16 %v804
        %v817 = vunpack.c.l.b16 %v805
        %v818 = vpack.c.b16 %v815, %v814
        %v819 = vpack.c.b16 %v817, %v816
        %v823 = vsel %vm646, %v801, 0
        %825 = vmatpush.bf16.msra.mxu0 0
        %826 = vmatpush.bf16.msra.mxu0 0
        %827 = vmatpush.bf16.msra.mxu0 0
        %828 = vmatpush.bf16.msra.mxu0 0
        %829 = vmatpush.bf16.msra.mxu0 0
        %830 = vmatpush.bf16.msra.mxu0 0
        %831 = vmatpush.bf16.msra.mxu0 %v819
        %832 = vmatpush.bf16.msra.mxu0 %v818
        %833 = vmatmul.bf16.gmra.mxu0 %v823
        %v834 = vpop.f32.mrf.mxu0
        %v835 = vadd.f32 %v808, %v834
        %v836 = vpop.f32.mrf.mxu0
        %v837 = vadd.f32 %v808, %v836
        %838 = vdwg.mxu0
        %vm839 = vcmp.gt.f32.partialorder %v835, 20.0
        %vm840 = vcmp.gt.f32.partialorder %v837, 20.0
        %v841 = vmin.f32 %v835, 20.0
        %v842 = vmin.f32 %v837, 20.0
        %v843 = vmul.f32 %v841, 1.442695
        %v844 = vpow.pop %v843
        %v845 = vmul.f32 %v842, 1.442695
        %v846 = vpow.pop %v845
        %v847 = vadd.f32 %v844, 1.0
        %v848 = vlog2.pop %v847
        %v849 = vmul.f32 %v848, 0.6931472
        %v850 = vmul.f32 -0.5, %v844
        %v851 = vadd.f32 %v850, 1.0
        %v852 = vmul.f32 %v851, %v844
        %v853 = vand.u32 2147483647, %v844
        %vm854 = vcmp.lt.f32.partialorder %v853, 0.0004427343
        %v855 = vsel %vm854, %v852, %v849
        %v856 = vadd.f32 %v846, 1.0
        %v857 = vlog2.pop %v856
        %v858 = vmul.f32 %v857, 0.6931472
        %v859 = vmul.f32 -0.5, %v846
        %v860 = vadd.f32 %v859, 1.0
        %v861 = vmul.f32 %v860, %v846
        %v862 = vand.u32 2147483647, %v846
        %vm863 = vcmp.lt.f32.partialorder %v862, 0.0004427343
        %v864 = vsel %vm863, %v861, %v858
        %v865 = vsel %vm839, %v835, %v855
        %v866 = vsel %vm840, %v837, %v864
        %v867 = vld [vmem:[%s613] sm:$0xff]
        %v868 = vld [vmem:[%s613 + $0x8] sm:$0xff]
        %871 = vrot.lane.b32.xlu0 %v867, 8
        %v872 = vpop.permute.xlu0 %871
        %873 = vrot.lane.b32.xlu0 %v868, 8
        %v874 = vpop.permute.xlu0 %873
        %v877 = vmul.f32 %v865, %v872
        %v878 = vmul.f32 %v866, %v874
        %881 = vrot.lane.b32.xlu0 %v877, 120
        %v882 = vpop.permute.xlu0 %881
        %883 = vrot.lane.b32.xlu0 %v878, 120
        %v884 = vpop.permute.xlu0 %883
        %v887 = vadd.f32 %v835, %v882
        %v888 = vadd.f32 %v837, %v884
        %v889 = vpack.c.bf16 %v888, %v887
        %v890 = vld [vmem:[%s9] sm:$0xf]
        %v891 = vld [vmem:[%s10] sm:$0x1]
        %v893 = vperm.slane %v891, 0
        %vm895 = vcmask 64512
        %v897 = vsel %vm895, %v889, 0
        %vm899 = vcmask 1043456
        %v901 = vsel %vm899, %v890, 0
        %903 = vmatpush.bf16.msra.mxu0 0
        %904 = vmatpush.bf16.msra.mxu0 0
        %905 = vmatpush.bf16.msra.mxu0 0
        %906 = vmatpush.bf16.msra.mxu0 0
        %907 = vmatpush.bf16.msra.mxu0 0
        %908 = vmatpush.bf16.msra.mxu0 0
        %909 = vmatpush.bf16.msra.mxu0 0
        %910 = vmatpush.bf16.msra.mxu0 %v901
        %911 = vmatmul.bf16.gmra.mxu0 %v897
        %v912 = vpop.f32.mrf.mxu0
        %v913 = vadd.f32 %v893, %v912
        %v914 = vpop.f32.mrf.mxu0
        %v915 = vadd.f32 %v893, %v914
        %916 = vdwg.mxu0
        %v917 = vsel %vm646, %v913, 0.0
        %918 = vadd.xlane.f32.xlu0 %v917
        %v919 = vpop.xlane.xlu0 %918
        %v920 = vsel %vm646, %v915, 0.0
        %921 = vadd.xlane.f32.xlu0 %v920
        %v922 = vpop.xlane.xlu0 %921
        %v923 = vmul.f32 %v919, %v676
        %v924 = vmul.f32 %v922, %v676
        %v925 = vsub.f32 %v913, %v923
        %v926 = vsub.f32 %v915, %v924
        %v927 = vmul.f32 %v925, %v925
        %v928 = vmul.f32 %v926, %v926
        %v929 = vsel %vm646, %v927, 0.0
        %930 = vadd.xlane.f32.xlu0 %v929
        %v931 = vpop.xlane.xlu0 %930
        %v932 = vsel %vm646, %v928, 0.0
        %933 = vadd.xlane.f32.xlu0 %v932
        %v934 = vpop.xlane.xlu0 %933
        %v935 = vmul.f32 %v931, %v676
        %v936 = vmul.f32 %v934, %v676
        %v937 = vadd.f32 %v935, 1e-05
        %v938 = vadd.f32 %v936, 1e-05
        %v939 = vrsqrt.pop %v937
        %v940 = vmul.f32 %v939, %v937
        %v941 = vmul.f32 %v940, %v939
        %v942 = vmul.f32 0.5, %v941
        %v943 = vsub.f32 1.5, %v942
        %v944 = vmul.f32 %v939, %v943
        %vm945 = vweird.f32 %v937
        %vm946 = vweird.f32 %v939
        %vm947 = vmor %vm945, %vm946
        %v948 = vsel %vm947, %v939, %v944
        %v949 = vrsqrt.pop %v938
        %v950 = vmul.f32 %v949, %v938
        %v951 = vmul.f32 %v950, %v949
        %v952 = vmul.f32 0.5, %v951
        %v953 = vsub.f32 1.5, %v952
        %v954 = vmul.f32 %v949, %v953
        %vm955 = vweird.f32 %v938
        %vm956 = vweird.f32 %v949
        %vm957 = vmor %vm955, %vm956
        %v958 = vsel %vm957, %v949, %v954
        %v959 = vmul.f32 %v925, %v948
        %v960 = vmul.f32 %v926, %v958
        %v961 = vmax.f32 %v959, 0.0
        %v962 = vmax.f32 %v960, 0.0
        %v963 = vpack.c.bf16 %v962, %v961
        %v964 = vld [vmem:[#allocation7] sm:$0xf]
        %v965 = vld [vmem:[#allocation7 + $0x4] sm:$0xf]
        %v966 = vld [vmem:[#allocation7 + $0x8] sm:$0xf]
        %v967 = vld [vmem:[#allocation7 + $0xc] sm:$0xf]
        %v968 = vld [vmem:[%s12] sm:$0x1]
        %v970 = vperm.slane %v968, 0
        %v976 = vunpack.c.l.b16 %v964
        %v977 = vunpack.c.l.b16 %v965
        %v978 = vunpack.c.l.b16 %v966
        %v979 = vunpack.c.l.b16 %v967
        %v980 = vpack.c.b16 %v977, %v976
        %v981 = vpack.c.b16 %v979, %v978
        %v985 = vsel %vm646, %v963, 0
        %987 = vmatpush.bf16.msra.mxu0 0
        %988 = vmatpush.bf16.msra.mxu0 0
        %989 = vmatpush.bf16.msra.mxu0 0
        %990 = vmatpush.bf16.msra.mxu0 0
        %991 = vmatpush.bf16.msra.mxu0 0
        %992 = vmatpush.bf16.msra.mxu0 0
        %993 = vmatpush.bf16.msra.mxu0 %v981
        %994 = vmatpush.bf16.msra.mxu0 %v980
        %995 = vmatmul.bf16.gmra.mxu0 %v985
        %v996 = vpop.f32.mrf.mxu0
        %v997 = vadd.f32 %v970, %v996
        %v998 = vpop.f32.mrf.mxu0
        %v999 = vadd.f32 %v970, %v998
        %1000 = vdwg.mxu0
        %v1001 = vsel %vm646, %v997, 0.0
        %1002 = vadd.xlane.f32.xlu0 %v1001
        %v1003 = vpop.xlane.xlu0 %1002
        %v1004 = vsel %vm646, %v999, 0.0
        %1005 = vadd.xlane.f32.xlu0 %v1004
        %v1006 = vpop.xlane.xlu0 %1005
        %v1007 = vmul.f32 %v1003, %v676
        %v1008 = vmul.f32 %v1006, %v676
        %v1009 = vsub.f32 %v997, %v1007
        %v1010 = vsub.f32 %v999, %v1008
        %v1011 = vmul.f32 %v1009, %v1009
        %v1012 = vmul.f32 %v1010, %v1010
        %v1013 = vsel %vm646, %v1011, 0.0
        %1014 = vadd.xlane.f32.xlu0 %v1013
        %v1015 = vpop.xlane.xlu0 %1014
        %v1016 = vsel %vm646, %v1012, 0.0
        %1017 = vadd.xlane.f32.xlu0 %v1016
        %v1018 = vpop.xlane.xlu0 %1017
        %v1019 = vmul.f32 %v1015, %v676
        %v1020 = vmul.f32 %v1018, %v676
        %v1021 = vadd.f32 %v1019, 1e-05
        %v1022 = vadd.f32 %v1020, 1e-05
        %v1023 = vrsqrt.pop %v1021
        %v1024 = vmul.f32 %v1023, %v1021
        %v1025 = vmul.f32 %v1024, %v1023
        %v1026 = vmul.f32 0.5, %v1025
        %v1027 = vsub.f32 1.5, %v1026
        %v1028 = vmul.f32 %v1023, %v1027
        %vm1029 = vweird.f32 %v1021
        %vm1030 = vweird.f32 %v1023
        %vm1031 = vmor %vm1029, %vm1030
        %v1032 = vsel %vm1031, %v1023, %v1028
        %v1033 = vrsqrt.pop %v1022
        %v1034 = vmul.f32 %v1033, %v1022
        %v1035 = vmul.f32 %v1034, %v1033
        %v1036 = vmul.f32 0.5, %v1035
        %v1037 = vsub.f32 1.5, %v1036
        %v1038 = vmul.f32 %v1033, %v1037
        %vm1039 = vweird.f32 %v1022
        %vm1040 = vweird.f32 %v1033
        %vm1041 = vmor %vm1039, %vm1040
        %v1042 = vsel %vm1041, %v1033, %v1038
        %v1043 = vmul.f32 %v1009, %v1032
        %v1044 = vmul.f32 %v1010, %v1042
        %v1045 = vmax.f32 %v1043, 0.0
        %v1046 = vmax.f32 %v1044, 0.0
        %v1047 = vpack.c.bf16 %v1046, %v1045
        %v1048 = vld [vmem:[#allocation8] sm:$0xf]
        %v1049 = vld [vmem:[#allocation8 + $0x4] sm:$0xf]
        %v1050 = vld [vmem:[#allocation8 + $0x8] sm:$0xf]
        %v1051 = vld [vmem:[#allocation8 + $0xc] sm:$0xf]
        %v1052 = vld [vmem:[%s14] sm:$0x1]
        %v1054 = vperm.slane %v1052, 0
        %v1060 = vunpack.c.l.b16 %v1048
        %v1061 = vunpack.c.l.b16 %v1049
        %v1062 = vunpack.c.l.b16 %v1050
        %v1063 = vunpack.c.l.b16 %v1051
        %v1064 = vpack.c.b16 %v1061, %v1060
        %v1065 = vpack.c.b16 %v1063, %v1062
        %v1069 = vsel %vm646, %v1047, 0
        %1071 = vmatpush.bf16.msra.mxu0 0
        %1072 = vmatpush.bf16.msra.mxu0 0
        %1073 = vmatpush.bf16.msra.mxu0 0
        %1074 = vmatpush.bf16.msra.mxu0 0
        %1075 = vmatpush.bf16.msra.mxu0 0
        %1076 = vmatpush.bf16.msra.mxu0 0
        %1077 = vmatpush.bf16.msra.mxu0 %v1065
        %1078 = vmatpush.bf16.msra.mxu0 %v1064
        %1079 = vmatmul.bf16.gmra.mxu0 %v1069
        %v1080 = vpop.f32.mrf.mxu0
        %v1081 = vadd.f32 %v1054, %v1080
        %v1082 = vpop.f32.mrf.mxu0
        %v1083 = vadd.f32 %v1054, %v1082
        %1084 = vdwg.mxu0
        %v1085 = vsel %vm646, %v1081, -inf
        %1086 = vmax.xlane.f32.xlu0 %v1085
        %v1087 = vpop.xlane.xlu0 %1086
        %v1088 = vsel %vm646, %v1083, -inf
        %1089 = vmax.xlane.f32.xlu0 %v1088
        %v1090 = vpop.xlane.xlu0 %1089
        %v1091 = vsub.f32 %v1081, %v1087
        %v1092 = vsub.f32 %v1083, %v1090
        %v1093 = vmul.f32 %v1091, 1.442695
        %v1094 = vpow.pop %v1093
        %v1095 = vmul.f32 %v1092, 1.442695
        %v1096 = vpow.pop %v1095
        %v1097 = vsel %vm646, %v1094, 0.0
        %1098 = vadd.xlane.f32.xlu0 %v1097
        %v1099 = vpop.xlane.xlu0 %1098
        %v1100 = vsel %vm646, %v1096, 0.0
        %1101 = vadd.xlane.f32.xlu0 %v1100
        %v1102 = vpop.xlane.xlu0 %1101
        %v1103 = vrcp.pop %v1099
        %v1104 = vmul.f32 %v1099, %v1103
        %v1105 = vsub.f32 1.0, %v1104
        %v1106 = vmul.f32 %v1103, %v1105
        %v1107 = vadd.f32 %v1103, %v1106
        %vm1108 = vweird.f32 %v1099
        %vm1109 = vweird.f32 %v1103
        %vm1110 = vmor %vm1108, %vm1109
        %v1111 = vsel %vm1110, %v1103, %v1107
        %v1112 = vand.u32 2147483647, %v1099
        %vm1113 = vcmp.eq.f32.partialorder %v1112, 8.507059e+37
        %v1114 = vand.u32 %v1099, 2147483648
        %v1115 = vor.u32 1.1754944e-38, %v1114
        %v1116 = vsel %vm1113, %v1115, %v1111
        %v1117 = vmul.f32 %v1094, %v1116
        %v1118 = vrcp.pop %v1102
        %v1119 = vmul.f32 %v1102, %v1118
        %v1120 = vsub.f32 1.0, %v1119
        %v1121 = vmul.f32 %v1118, %v1120
        %v1122 = vadd.f32 %v1118, %v1121
        %vm1123 = vweird.f32 %v1102
        %vm1124 = vweird.f32 %v1118
        %vm1125 = vmor %vm1123, %vm1124
        %v1126 = vsel %vm1125, %v1118, %v1122
        %v1127 = vand.u32 2147483647, %v1102
        %vm1128 = vcmp.eq.f32.partialorder %v1127, 8.507059e+37
        %v1129 = vand.u32 %v1102, 2147483648
        %v1130 = vor.u32 1.1754944e-38, %v1129
        %v1131 = vsel %vm1128, %v1130, %v1126
        %v1132 = vmul.f32 %v1096, %v1131
        %v1133 = vld [vmem:[#allocation2] sm:$0x1]
        %vm1134 = vcmp.gt.f32.partialorder %v1133, 20.0
        %v1135 = vmin.f32 %v1133, 20.0
        %v1136 = vmul.f32 %v1135, 1.442695
        %v1137 = vpow.pop %v1136
        %v1138 = vadd.f32 %v1137, 1.0
        %v1139 = vlog2.pop %v1138
        %v1140 = vmul.f32 %v1139, 0.6931472
        %v1141 = vmul.f32 -0.5, %v1137
        %v1142 = vadd.f32 %v1141, 1.0
        %v1143 = vmul.f32 %v1142, %v1137
        %v1144 = vand.u32 2147483647, %v1137
        %vm1145 = vcmp.lt.f32.partialorder %v1144, 0.0004427343
        %v1146 = vsel %vm1145, %v1143, %v1140
        %v1147 = vsel %vm1134, %v1133, %v1146
        %v1149 = vperm.slane %v1147, 0
        %v1151 = vmul.f32 %v1117, %v1149
        %v1152 = vmul.f32 %v1132, %v1149
        %1153 = vst.msk [vmem:[%s602] sm:$0xff] %vm646, %v1151
        %1154 = vst.msk [vmem:[%s602 + $0x8] sm:$0xff] %vm646, %v1152
        %1157 = vrot.lane.b32.xlu0 %v835, 8
        %v1158 = vpop.permute.xlu0 %1157
        %1159 = vrot.lane.b32.xlu0 %v837, 8
        %v1160 = vpop.permute.xlu0 %1159
        %1165 = vrot.lane.b32.xlu0 %v865, 8
        %v1166 = vpop.permute.xlu0 %1165
        %1167 = vrot.lane.b32.xlu0 %v866, 8
        %v1168 = vpop.permute.xlu0 %1167
        %v1171 = vsel %vm895, %v887, %v1158
        %v1172 = vsel %vm895, %v888, %v1160
        %vm1173 = vcmask 130048
        %v1174 = vsel %vm1173, %v1171, %v1166
        %v1175 = vsel %vm1173, %v1172, %v1168
        %vm1176 = vcmask 195584
        %1177 = vst.msk [vmem:[%s619] sm:$0xff] %vm1176, %v1174
        %1178 = vst.msk [vmem:[%s619 + $0x8] sm:$0xff] %vm1176, %v1175
        %s1179 = smul.u32 2, %s34
        %p1180 = scmp.lt.s32.totalorder %s1179, 3
        %s1181 = scalar_select %p1180, %s1179, 3
        %s1182 = smul.addr %s1181, 8
        %s1183 = scalar_lea.vmem %s15, %s1182
        %s1184 = sand.u32 %s393, 1
        %s1185 = scalar_lea.sflag [#allocation4], %s1184
        %s1186 = sand.u32 %s393, 1
        %s1187 = smul.addr %s1186, 16
        %s1188 = scalar_lea.vmem [#allocation10], %s1187
        // Predicated region
        $region97: #{tpu_custom_call.1} parent=79 // pred_check
          %p1189 = pneg %p377
        $region98: #{tpu_custom_call.1} parent=79 // pred_check_branch
          %1191 = sbr.rel (%p1189) target = $region100
        $region99: #{tpu_custom_call.1} parent=79 // pred_region
          %s1192 = smul.u32 2, %s34
        $region100: #{tpu_custom_call.1} parent=79 // pred_fallthru
          _
        // Predicated region
        $region101: #{tpu_custom_call.1} parent=79 // pred_check
          %p1193 = pneg %p403
        $region102: #{tpu_custom_call.1} parent=79 // pred_check_branch
          %1195 = sbr.rel (%p1193) target = $region104
        $region103: #{tpu_custom_call.1} parent=79 // pred_region
          %s1196 = smul.u32 2, %s34
          %1198 = vsyncadd %s1185, 0
          %s1199 = smul.addr %s1196, 8
          %s1200 = scalar_lea.hbm %s16, %s1199
          %s1201 = sshll.u32 %s1188, 4
          %s1202 = int_to_ptr.vmem [resolvable:$true] %s1201
          %s1203 = sshll.u32 %s1200, 4
          %s1204 = int_to_ptr.hbm [resolvable:$true] %s1203
          %1209 = dma.vmem_to_hbm [thread:$0]  %s1202, 256, %s1204, %s1185, 128, 128, 8
        $region104: #{tpu_custom_call.1} parent=79 // pred_fallthru
          _
      $region80: #{tpu_custom_call.1} parent=5 // pred_fallthru
        _
      %p1210 = scmp.le.s32.totalorder 2, %s29
      // Predicated region
      $region105: #{tpu_custom_call.1} parent=5 // pred_check
        %p1211 = pneg %p1210
      $region106: #{tpu_custom_call.1} parent=5 // pred_check_branch
        %1213 = sbr.rel (%p1211) target = $region108
      $region107: #{tpu_custom_call.1} parent=5 // pred_region
        %s1214 = ssub.s32 %s29, 2
        // Predicated region
        $region109: #{tpu_custom_call.1} parent=107 // pred_check
          %p1215 = pneg %p383
        $region110: #{tpu_custom_call.1} parent=107 // pred_check_branch
          %1217 = sbr.rel (%p1215) target = $region112
        $region111: #{tpu_custom_call.1} parent=107 // pred_region
          %s1218 = smul.u32 2, %s35
          %p1219 = scmp.lt.s32.totalorder %s1218, 3
          %s1220 = scalar_select %p1219, %s1218, 3
          %s1221 = smul.addr %s1220, 8
          %s1222 = scalar_lea.vmem %s15, %s1221
        $region112: #{tpu_custom_call.1} parent=107 // pred_fallthru
          _
        // Predicated region
        $region113: #{tpu_custom_call.1} parent=107 // pred_check
          %p1223 = pneg %p409
        $region114: #{tpu_custom_call.1} parent=107 // pred_check_branch
          %1225 = sbr.rel (%p1223) target = $region116
        $region115: #{tpu_custom_call.1} parent=107 // pred_region
          %s1226 = sand.u32 %s394, 1
          %s1227 = scalar_lea.sflag [#allocation4], %s1226
          %s1228 = sand.u32 %s394, 1
          %s1229 = smul.addr %s1228, 16
          %s1230 = scalar_lea.vmem [#allocation10], %s1229
          %1232 = dma.done %s1227, 256
        $region116: #{tpu_custom_call.1} parent=107 // pred_fallthru
          _
      $region108: #{tpu_custom_call.1} parent=5 // pred_fallthru
        _
    $region6: #{tpu_custom_call.1} parent=1 // loop_footer
      %s33 = sadd.s32 1, %s29
    $region7: #{tpu_custom_call.1} parent=1 // loop_footer_branch
      %28 = sbr.rel target = $region3
    $region8: #{tpu_custom_call.1} parent=1 // loop_exit
      _
    %1233 = vsyncpa [#allocation3], 1
    %s1234 = scalar_lea.sflag [#allocation3], 1
    %1235 = vsyncpa %s1234, 1
    %1236 = vsyncpa [#allocation6], 1
    %1237 = vsyncpa [#allocation9], 1
    %1238 = vsyncpa [#allocation4], 1
    %s1239 = scalar_lea.sflag [#allocation4], 1
    %1240 = vsyncpa %s1239, 1

</llo_original>
